<compile_context>
chip_gen: v6e
topology: v6e:2x2x1
jax: 0.10.0
libtpu: 0.0.40
codegen_flags: <defaults>
</compile_context>

<pallas_src>
import functools

import jax
import jax.numpy as jnp
from jax.experimental import pallas as pl
from jax.experimental.pallas import tpu as pltpu


# --------------------------------------------------------------------------------
# generation-aware tuning knobs
# --------------------------------------------------------------------------------
def _vmem_budgets():
    """(per-operand tile byte budget, default scoped vmem limit, vmem capacity)."""
    cap = 64 * 1024 * 1024                      # conservative default (v7x physical)
    try:
        cap_q = int(getattr(pltpu.get_tpu_info(), "vmem_capacity_bytes", 0))
        if cap_q > 0:
            cap = cap_q
    except Exception:
        pass
    if cap >= 100 * 1024 * 1024:                # v5e / v6e: 128 MiB VMEM
        return 6 * 1024 * 1024, 96 * 1024 * 1024, cap
    return 2 * 1024 * 1024, 32 * 1024 * 1024, cap     # v7x: 64 MiB physical


def _vmem_limit(default, cap, *tile_bytes):
    """Scoped-VMEM limit that actually covers the chosen (double-buffered) tiles."""
    need = 3 * sum(tile_bytes) + (4 << 20)      # double-buffering + f32 temporaries
    return int(min(max(default, need), cap * 3 // 4))


def _pick_c_tile(c, lanes, budget):
    """Largest multiple-of-8 divisor of c whose (tc, lanes) f32 tile fits budget.

    Falls back to the smallest legal divisor (8) when nothing fits; the caller
    raises vmem_limit_bytes from the actual tile size, so this never hard-fails.
    """
    if c % 8 != 0 or c * lanes * 4 <= budget:
        return c
    divisors = [tc for tc in range(8, c + 1, 8) if c % tc == 0]
    fitting = [tc for tc in divisors if tc * lanes * 4 <= budget]
    return max(fitting) if fitting else min(divisors)


def _pick_l_tile(l_out, rows, budget):
    """Lane tile: full length if it fits; else a large multiple of 128, preferring
    one that divides l_out (avoids ragged-tail masking in pass 2)."""
    if l_out <= 256 or l_out * rows * 4 <= budget:
        return l_out
    cand = max(256, (budget // (rows * 4)) // 128 * 128)
    cand = min(cand, l_out)
    for tl in range(cand, 255, -128):
        if l_out % tl == 0:
            return tl
    return cand


# --------------------------------------------------------------------------------
# pass 1: depthwise conv -> dw (bf16) + per-(sample, channel) BN1 sum / sum-of-squares
# --------------------------------------------------------------------------------
def _depthwise_stats_kernel(x_ref, wdw_ref, dw_ref, s1_ref, *,
                            k_size, stride, l_phase, l_out):
    x = x_ref[...].astype(jnp.float32)            # (TC, stride * l_phase)
    w = wdw_ref[...].astype(jnp.float32)          # (TC, K)
    tc = x.shape[0]

    # Wrapper pre-pads / phase-de-interleaves x, so every tap is a contiguous
    # static lane slice: no per-tap validity mask, no cross-lane roll, and the
    # same code path handles stride == 1 and stride > 1.
    acc = jnp.zeros((tc, l_out), jnp.float32)
    for k in range(k_size):                       # K small & static: unrolled
        off = (k % stride) * l_phase + (k // stride)
        acc = acc + x[:, off:off + l_out] * w[:, k:k + 1]

    # dw is write-once / read-twice and all passes are HBM-bound -> store bf16.
    # BN1 statistics are taken from the f32 accumulator BEFORE the downcast.
    dw_ref[...] = acc.astype(dw_ref.dtype)
    s1_ref[...] = jnp.concatenate(
        [jnp.sum(acc, axis=1, keepdims=True),
         jnp.sum(acc * acc, axis=1, keepdims=True)], axis=1)      # (TC, 2)


# --------------------------------------------------------------------------------
# shared helpers for passes 2 & 3
# --------------------------------------------------------------------------------
def _bn_scale_shift(stats, gamma, beta, inv_count, eps):
    """Fold batch-stats BN into per-channel (scale, shift); one-pass var clamped >= 0."""
    mean = stats[:, 0:1] * inv_count
    var = jnp.maximum(stats[:, 1:2] * inv_count - mean * mean, 0.0)
    rstd = jax.lax.rsqrt(var + eps)
    scale = gamma * rstd
    return scale, beta - mean * scale


def _pointwise_y(dw, s1_ref, p1_ref, wpw_ref, inv_count, eps, valid=None):
    """BN1 + SiLU + pointwise 1x1 conv as one lane-dense bf16 MXU matmul (f32 acc)."""
    p1 = p1_ref[...]
    scale1, shift1 = _bn_scale_shift(s1_ref[...], p1[:, 0:1], p1[:, 1:2],
                                     inv_count, eps)
    h = dw.astype(jnp.float32) * scale1 + shift1
    h = h * jax.nn.sigmoid(h)                     # SiLU
    if valid is not None:                         # mask h once before the matmul
        h = jnp.where(valid, h, 0.0)
    return jnp.dot(wpw_ref[...], h.astype(jnp.bfloat16),
                   preferred_element_type=jnp.float32)            # (O, TL)


# --------------------------------------------------------------------------------
# pass 2: BN1-apply + SiLU + pointwise matmul -> per-(sample, out-ch) BN2 sum / sumsq
# --------------------------------------------------------------------------------
def _stats2_kernel(dw_ref, s1_ref, p1_ref, wpw_ref, s2_ref, *,
                   inv_count, eps, l_tile, l_out):
    j = pl.program_id(1)

    @pl.when(j == 0)
    def _():
        s2_ref[...] = jnp.zeros_like(s2_ref)

    valid = None
    if l_out % l_tile != 0:                       # ragged tail: mask h (C,TL) once
        col = j * l_tile + jax.lax.broadcasted_iota(jnp.int32, dw_ref.shape, 1)
        valid = col < l_out

    y = _pointwise_y(dw_ref[...], s1_ref, p1_ref, wpw_ref, inv_count, eps, valid)
    s2_ref[...] += jnp.concatenate(
        [jnp.sum(y, axis=1, keepdims=True),
         jnp.sum(y * y, axis=1, keepdims=True)], axis=1)          # (O, 2)


# --------------------------------------------------------------------------------
# pass 3: BN1 + SiLU + pointwise (recomputed) + BN2 + SiLU -> output
# --------------------------------------------------------------------------------
def _apply_kernel(dw_ref, s1_ref, p1_ref, wpw_ref, s2_ref, p2_ref, o_ref, *,
                  inv_count, eps):
    y = _pointwise_y(dw_ref[...], s1_ref, p1_ref, wpw_ref, inv_count, eps)
    p2 = p2_ref[...]
    scale2, shift2 = _bn_scale_shift(s2_ref[...], p2[:, 0:1], p2[:, 1:2],
                                     inv_count, eps)
    z = y * scale2 + shift2
    z = z * jax.nn.sigmoid(z)
    o_ref[...] = z.astype(o_ref.dtype)


# --------------------------------------------------------------------------------
# wrapper
# --------------------------------------------------------------------------------
@functools.partial(jax.jit, static_argnames=("kernel_size", "stride", "padding", "eps"))
def depthwise_separable_conv1d(x, params, *, kernel_size=1, stride=1, padding=0,
                               eps=1e-5):
    """x: (N, C, L) f32. params: (wdw(C,K), bdw(C,), g1(C,), b1(C,),
    wpw(O,C), bpw(O,), g2(O,), b2(O,))."""
    wdw, bdw, g1, b1, wpw, bpw, g2, b2 = params
    # A per-channel conv bias immediately followed by training-mode BatchNorm is
    # exactly cancelled by the batch-mean subtraction -> drop both biases.
    del bdw, bpw

    N, C, L = x.shape
    O = wpw.shape[0]
    # The reference module applies BatchNorm1d(in_channels) after the pointwise
    # conv, so its forward only runs when out_channels == in_channels.
    assert O == C, "reference module requires out_channels == in_channels"
    K = kernel_size

    lp = L + 2 * padding
    l_out = (lp - K) // stride + 1
    assert l_out > 0, "empty output length"

    # Zero-padded and (for stride>1) phase-de-interleaved input layout so every
    # depthwise tap becomes a contiguous static lane slice inside the kernel.
    #   x_cat[:, :, p * l_phase + a] == x_padded[:, :, a * stride + p]
    if stride == 1:
        l_phase = lp
        x_cat = jnp.pad(x, ((0, 0), (0, 0), (padding, padding))) if padding else x
    else:
        l_phase = pl.cdiv(lp, stride)
        right = l_phase * stride - L - padding
        x_pad = jnp.pad(x, ((0, 0), (0, 0), (padding, right)))
        x_cat = (x_pad.reshape(N, C, l_phase, stride)
                      .transpose(0, 1, 3, 2)
                      .reshape(N, C, stride * l_phase))
    l_cat = stride * l_phase

    tile_budget, vmem_default, vmem_cap = _vmem_budgets()

    # ---- pass 1: depthwise conv + per-(n, channel-block) BN1 partial stats ------
    tc = _pick_c_tile(C, l_cat, tile_budget)
    n_cb = C // tc
    vmem1 = _vmem_limit(vmem_default, vmem_cap,
                        tc * l_cat * 4, tc * l_out * 2, tc * K * 4, tc * 8)
    dw, s1n = pl.pallas_call(
        functools.partial(_depthwise_stats_kernel, k_size=K, stride=stride,
                          l_phase=l_phase, l_out=l_out),
        out_shape=(jax.ShapeDtypeStruct((N, C, l_out), jnp.bfloat16),
                   jax.ShapeDtypeStruct((N, C, 2), jnp.float32)),
        grid=(n_cb, N),
        in_specs=[pl.BlockSpec((None, tc, l_cat), lambda c, n: (n, c, 0)),
                  pl.BlockSpec((tc, K), lambda c, n: (c, 0))],
        out_specs=(pl.BlockSpec((None, tc, l_out), lambda c, n: (n, c, 0)),
                   pl.BlockSpec((None, tc, 2), lambda c, n: (n, c, 0))),
        compiler_params=pltpu.CompilerParams(
            dimension_semantics=("parallel", "parallel"),
            vmem_limit_bytes=vmem1),
    )(x_cat, wdw)
    s1 = jnp.sum(s1n, axis=0)                     # (C, 2) exact partial-sum reduce

    # small per-channel BN params packed into single operands
    p1 = jnp.stack([g1, b1], axis=1)              # (C, 2)
    p2 = jnp.stack([g2, b2], axis=1)              # (O, 2)
    wpw_bf16 = wpw.astype(jnp.bfloat16)           # MXU operand dtype (f32 accumulate)

    tl = _pick_l_tile(l_out, C + O, tile_budget)
    n_lb = pl.cdiv(l_out, tl)
    inv_count = 1.0 / float(N * l_out)
    vmem23 = _vmem_limit(vmem_default, vmem_cap,
                         C * tl * 2, O * tl * 4, (C + O) * tl * 4, O * C * 2)

    # ---- pass 2: BN2 partial stats per sample, tiled over (N, L-blocks) ---------
    s2n = pl.pallas_call(
        functools.partial(_stats2_kernel, inv_count=inv_count, eps=eps,
                          l_tile=tl, l_out=l_out),
        out_shape=jax.ShapeDtypeStruct((N, O, 2), jnp.float32),
        grid=(N, n_lb),
        in_specs=[pl.BlockSpec((None, C, tl), lambda n, j: (n, 0, j)),
                  pl.BlockSpec((C, 2), lambda n, j: (0, 0)),
                  pl.BlockSpec((C, 2), lambda n, j: (0, 0)),
                  pl.BlockSpec((O, C), lambda n, j: (0, 0))],
        out_specs=pl.BlockSpec((None, O, 2), lambda n, j: (n, 0, 0)),
        compiler_params=pltpu.CompilerParams(
            dimension_semantics=("parallel", "arbitrary"),
            vmem_limit_bytes=vmem23),
    )(dw, s1, p1, wpw_bf16)
    s2 = jnp.sum(s2n, axis=0)                     # (O, 2)

    # ---- pass 3: apply everything, tiled over (N, L-blocks), fully parallel -----
    out = pl.pallas_call(
        functools.partial(_apply_kernel, inv_count=inv_count, eps=eps),
        out_shape=jax.ShapeDtypeStruct((N, O, l_out), x.dtype),
        grid=(N, n_lb),
        in_specs=[pl.BlockSpec((None, C, tl), lambda n, j: (n, 0, j)),
                  pl.BlockSpec((C, 2), lambda n, j: (0, 0)),
                  pl.BlockSpec((C, 2), lambda n, j: (0, 0)),
                  pl.BlockSpec((O, C), lambda n, j: (0, 0)),
                  pl.BlockSpec((O, 2), lambda n, j: (0, 0)),
                  pl.BlockSpec((O, 2), lambda n, j: (0, 0))],
        out_specs=pl.BlockSpec((None, O, tl), lambda n, j: (n, 0, j)),
        compiler_params=pltpu.CompilerParams(
            dimension_semantics=("parallel", "parallel"),
            vmem_limit_bytes=vmem23),
    )(dw, s1, p1, wpw_bf16, s2, p2)

    return out


# --------------------------------------------------------------------------------
# pure-JAX reference (matches the PyTorch training-mode forward, f32 everywhere)
# --------------------------------------------------------------------------------
def _reference(x, params, kernel_size, stride, padding, eps=1e-5):
    wdw, bdw, g1, b1, wpw, bpw, g2, b2 = params

    def bn(t, g, b):
        m = t.mean(axis=(0, 2), keepdims=True)
        v = ((t - m) ** 2).mean(axis=(0, 2), keepdims=True)
        return (t - m) * jax.lax.rsqrt(v + eps) * g[None, :, None] + b[None, :, None]

    dw = jax.lax.conv_general_dilated(
        x, wdw[:, None, :], window_strides=(stride,),
        padding=[(padding, padding)],
        dimension_numbers=('NCH', 'OIH', 'NCH'),
        feature_group_count=x.shape[1]) + bdw[None, :, None]
    h = bn(dw, g1, b1)
    h = h * jax.nn.sigmoid(h)
    pw = jnp.einsum('oc,ncl->nol', wpw, h) + bpw[None, :, None]
    z = bn(pw, g2, b2)
    return z * jax.nn.sigmoid(z)


if __name__ == "__main__":
    key = jax.random.PRNGKey(0)
    N, C, L = 4, 8, 128
    O = C                       # required by the reference module (see assert)
    K = 3

    ks = jax.random.split(key, 9)
    x   = jax.random.normal(ks[0], (N, C, L), jnp.float32)
    wdw = 0.5 * jax.random.normal(ks[1], (C, K), jnp.float32)   # depthwise (C,1,K) squeezed
    bdw = 0.1 * jax.random.normal(ks[2], (C,), jnp.float32)
    g1  = 1.0 + 0.1 * jax.random.normal(ks[3], (C,), jnp.float32)
    b1  = 0.1 * jax.random.normal(ks[4], (C,), jnp.float32)
    wpw = 0.5 * jax.random.normal(ks[5], (O, C), jnp.float32)   # pointwise (O,C,1) squeezed
    bpw = 0.1 * jax.random.normal(ks[6], (O,), jnp.float32)
    g2  = 1.0 + 0.1 * jax.random.normal(ks[7], (O,), jnp.float32)
    b2  = 0.1 * jax.random.normal(ks[8], (O,), jnp.float32)
    params = (wdw, bdw, g1, b1, wpw, bpw, g2, b2)

    # exercise both the stride==1 path and the de-interleaved stride>1 path
    for stride, padding in ((1, 1), (2, 1)):
        out = depthwise_separable_conv1d(x, params, kernel_size=K,
                                         stride=stride, padding=padding)
        jax.block_until_ready(out)
        ref = _reference(x, params, K, stride, padding)
        l_out = (L + 2 * padding - K) // stride + 1
        assert out.shape == ref.shape == (N, O, l_out)
        # bf16 dw intermediate + bf16 MXU operands (f32 accumulation) => looser
        # tolerance than a pure-f32 comparison.
        assert bool(jnp.allclose(out, ref, atol=6e-2, rtol=6e-2)), \
            f"mismatch vs JAX reference (stride={stride}, padding={padding})"

    print("KERNEL_OK")
</pallas_src>

<mosaic_0001>
module attributes {stable_mosaic.version = 11 : i64} {
  func.func @_depthwise_stats_kernel(%arg0: i32, %arg1: i32, %arg2: memref<1x8x130xf32, #tpu.memory_space<vmem>>, %arg3: memref<8x3xf32, #tpu.memory_space<vmem>>, %arg4: memref<1x8x128xbf16, #tpu.memory_space<vmem>>, %arg5: memref<1x8x2xf32, #tpu.memory_space<vmem>>) attributes {dimension_semantics = [#tpu.dimension_semantics<parallel>, #tpu.dimension_semantics<parallel>], iteration_bounds = array<i64: 1, 4>, scalar_prefetch = 0 : i64, scratch_operands = 0 : i64, tpu.core_type = #tpu.core_type<tc>, window_params = [{transform_indices = @transform_0, window_bounds = array<i64: 1, 8, 130>}, {transform_indices = @transform_1, window_bounds = array<i64: 8, 3>}, {transform_indices = @transform_2, window_bounds = array<i64: 1, 8, 128>}, {transform_indices = @transform_3, window_bounds = array<i64: 1, 8, 2>}]} {
    %c0 = arith.constant 0 : index
    %c0_0 = arith.constant 0 : index
    %c0_1 = arith.constant 0 : index
    %0 = vector.load %arg2[%c0, %c0_0, %c0_1] : memref<1x8x130xf32, #tpu.memory_space<vmem>>, vector<1x8x130xf32>
    %1 = vector.shape_cast %0 : vector<1x8x130xf32> to vector<8x130xf32>
    %c0_2 = arith.constant 0 : index
    %c0_3 = arith.constant 0 : index
    %2 = vector.load %arg3[%c0_2, %c0_3] : memref<8x3xf32, #tpu.memory_space<vmem>>, vector<8x3xf32>
    %cst = arith.constant 0.000000e+00 : f32
    %3 = vector.broadcast %cst : f32 to vector<8x128xf32>
    %4 = vector.extract_strided_slice %1 {offsets = [0, 0], sizes = [8, 128], strides = [1, 1]} : vector<8x130xf32> to vector<8x128xf32>
    %5 = vector.extract_strided_slice %2 {offsets = [0, 0], sizes = [8, 1], strides = [1, 1]} : vector<8x3xf32> to vector<8x1xf32>
    %6 = vector.broadcast %5 : vector<8x1xf32> to vector<8x128xf32>
    %7 = arith.mulf %4, %6 : vector<8x128xf32>
    %8 = arith.addf %3, %7 : vector<8x128xf32>
    %9 = vector.extract_strided_slice %1 {offsets = [0, 1], sizes = [8, 128], strides = [1, 1]} : vector<8x130xf32> to vector<8x128xf32>
    %10 = vector.extract_strided_slice %2 {offsets = [0, 1], sizes = [8, 1], strides = [1, 1]} : vector<8x3xf32> to vector<8x1xf32>
    %11 = vector.broadcast %10 : vector<8x1xf32> to vector<8x128xf32>
    %12 = arith.mulf %9, %11 : vector<8x128xf32>
    %13 = arith.addf %8, %12 : vector<8x128xf32>
    %14 = vector.extract_strided_slice %1 {offsets = [0, 2], sizes = [8, 128], strides = [1, 1]} : vector<8x130xf32> to vector<8x128xf32>
    %15 = vector.extract_strided_slice %2 {offsets = [0, 2], sizes = [8, 1], strides = [1, 1]} : vector<8x3xf32> to vector<8x1xf32>
    %16 = vector.broadcast %15 : vector<8x1xf32> to vector<8x128xf32>
    %17 = arith.mulf %14, %16 : vector<8x128xf32>
    %18 = arith.addf %13, %17 : vector<8x128xf32>
    %19 = arith.truncf %18 : vector<8x128xf32> to vector<8x128xbf16>
    %c0_4 = arith.constant 0 : index
    %c0_5 = arith.constant 0 : index
    %c0_6 = arith.constant 0 : index
    %20 = vector.load %arg4[%c0_4, %c0_5, %c0_6] : memref<1x8x128xbf16, #tpu.memory_space<vmem>>, vector<1x8x128xbf16>
    %21 = vector.shape_cast %20 : vector<1x8x128xbf16> to vector<8x128xbf16>
    %22 = vector.shape_cast %19 : vector<8x128xbf16> to vector<1x8x128xbf16>
    tpu.vector_store %arg4[%c0_4, %c0_5, %c0_6], %22 {strides = array<i32>} : memref<1x8x128xbf16, #tpu.memory_space<vmem>>, vector<1x8x128xbf16>,
    %cst_7 = arith.constant dense<0.000000e+00> : vector<8xf32>
    %23 = vector.multi_reduction <add>, %18, %cst_7 [1] : vector<8x128xf32> to vector<8xf32>
    %24 = vector.shape_cast %23 : vector<8xf32> to vector<8x1xf32>
    %25 = arith.mulf %18, %18 : vector<8x128xf32>
    %cst_8 = arith.constant dense<0.000000e+00> : vector<8xf32>
    %26 = vector.multi_reduction <add>, %25, %cst_8 [1] : vector<8x128xf32> to vector<8xf32>
    %27 = vector.shape_cast %26 : vector<8xf32> to vector<8x1xf32>
    %28 = tpu.concatenate %24, %27 in 1 : vector<8x1xf32>, vector<8x1xf32> -> vector<8x2xf32>
    %c0_9 = arith.constant 0 : index
    %c0_10 = arith.constant 0 : index
    %c0_11 = arith.constant 0 : index
    %29 = vector.load %arg5[%c0_9, %c0_10, %c0_11] : memref<1x8x2xf32, #tpu.memory_space<vmem>>, vector<1x8x2xf32>
    %30 = vector.shape_cast %29 : vector<1x8x2xf32> to vector<8x2xf32>
    %31 = vector.shape_cast %28 : vector<8x2xf32> to vector<1x8x2xf32>
    tpu.vector_store %arg5[%c0_9, %c0_10, %c0_11], %31 {strides = array<i32>} : memref<1x8x2xf32, #tpu.memory_space<vmem>>, vector<1x8x2xf32>,
    return
  }
  func.func @transform_0(%arg0: i32, %arg1: i32) -> (i32, i32, i32) {
    %c0_i32 = arith.constant 0 : i32
    %c0_i32_0 = arith.constant 0 : i32
    return %arg1, %arg0, %c0_i32 : i32, i32, i32
  }
  func.func @transform_1(%arg0: i32, %arg1: i32) -> (i32, i32) {
    %c0_i32 = arith.constant 0 : i32
    %c0_i32_0 = arith.constant 0 : i32
    return %arg0, %c0_i32 : i32, i32
  }
  func.func @transform_2(%arg0: i32, %arg1: i32) -> (i32, i32, i32) {
    %c0_i32 = arith.constant 0 : i32
    %c0_i32_0 = arith.constant 0 : i32
    return %arg1, %arg0, %c0_i32 : i32, i32, i32
  }
  func.func @transform_3(%arg0: i32, %arg1: i32) -> (i32, i32, i32) {
    %c0_i32 = arith.constant 0 : i32
    %c0_i32_0 = arith.constant 0 : i32
    return %arg1, %arg0, %c0_i32 : i32, i32, i32
  }
}

module attributes {stable_mosaic.version = 11 : i64} {
  func.func @_stats2_kernel(%arg0: i32, %arg1: i32, %arg2: memref<1x8x128xbf16, #tpu.memory_space<vmem>>, %arg3: memref<8x2xf32, #tpu.memory_space<vmem>>, %arg4: memref<8x2xf32, #tpu.memory_space<vmem>>, %arg5: memref<8x8xbf16, #tpu.memory_space<vmem>>, %arg6: memref<1x8x2xf32, #tpu.memory_space<vmem>>) attributes {dimension_semantics = [#tpu.dimension_semantics<parallel>, #tpu.dimension_semantics<arbitrary>], iteration_bounds = array<i64: 4, 1>, scalar_prefetch = 0 : i64, scratch_operands = 0 : i64, tpu.core_type = #tpu.core_type<tc>, window_params = [{transform_indices = @transform_0, window_bounds = array<i64: 1, 8, 128>}, {pipeline_mode = #tpu.pipeline_mode<synchronous>, transform_indices = @transform_1, window_bounds = array<i64: 8, 2>}, {pipeline_mode = #tpu.pipeline_mode<synchronous>, transform_indices = @transform_2, window_bounds = array<i64: 8, 2>}, {pipeline_mode = #tpu.pipeline_mode<synchronous>, transform_indices = @transform_3, window_bounds = array<i64: 8, 8>}, {transform_indices = @transform_4, window_bounds = array<i64: 1, 8, 2>}]} {
    %c0_i32 = arith.constant 0 : i32
    %0 = arith.cmpi eq, %arg1, %c0_i32 : i32
    %1 = arith.extui %0 : i1 to i32
    %c0_i32_0 = arith.constant 0 : i32
    %2 = arith.cmpi ne, %1, %c0_i32_0 : i32
    scf.if %2 {
      %cst_22 = arith.constant 0.000000e+00 : f32
      %51 = vector.broadcast %cst_22 : f32 to vector<8x2xf32>
      %c0_23 = arith.constant 0 : index
      %c0_24 = arith.constant 0 : index
      %c0_25 = arith.constant 0 : index
      %52 = vector.load %arg6[%c0_23, %c0_24, %c0_25] : memref<1x8x2xf32, #tpu.memory_space<vmem>>, vector<1x8x2xf32>
      %53 = vector.shape_cast %52 : vector<1x8x2xf32> to vector<8x2xf32>
      %54 = vector.shape_cast %51 : vector<8x2xf32> to vector<1x8x2xf32>
      tpu.vector_store %arg6[%c0_23, %c0_24, %c0_25], %54 {strides = array<i32>} : memref<1x8x2xf32, #tpu.memory_space<vmem>>, vector<1x8x2xf32>,
    } else {
    }
    %c0 = arith.constant 0 : index
    %c0_1 = arith.constant 0 : index
    %c0_2 = arith.constant 0 : index
    %3 = vector.load %arg2[%c0, %c0_1, %c0_2] : memref<1x8x128xbf16, #tpu.memory_space<vmem>>, vector<1x8x128xbf16>
    %4 = vector.shape_cast %3 : vector<1x8x128xbf16> to vector<8x128xbf16>
    %c0_3 = arith.constant 0 : index
    %c0_4 = arith.constant 0 : index
    %5 = vector.load %arg4[%c0_3, %c0_4] : memref<8x2xf32, #tpu.memory_space<vmem>>, vector<8x2xf32>
    %c0_5 = arith.constant 0 : index
    %c0_6 = arith.constant 0 : index
    %6 = vector.load %arg3[%c0_5, %c0_6] : memref<8x2xf32, #tpu.memory_space<vmem>>, vector<8x2xf32>
    %7 = vector.extract_strided_slice %5 {offsets = [0, 0], sizes = [8, 1], strides = [1, 1]} : vector<8x2xf32> to vector<8x1xf32>
    %8 = vector.extract_strided_slice %5 {offsets = [0, 1], sizes = [8, 1], strides = [1, 1]} : vector<8x2xf32> to vector<8x1xf32>
    %9 = vector.extract_strided_slice %6 {offsets = [0, 0], sizes = [8, 1], strides = [1, 1]} : vector<8x2xf32> to vector<8x1xf32>
    %cst = arith.constant 0.001953125 : f32
    %10 = vector.broadcast %cst : f32 to vector<8x1xf32>
    %11 = arith.mulf %9, %10 : vector<8x1xf32>
    %12 = vector.extract_strided_slice %6 {offsets = [0, 1], sizes = [8, 1], strides = [1, 1]} : vector<8x2xf32> to vector<8x1xf32>
    %cst_7 = arith.constant 0.001953125 : f32
    %13 = vector.broadcast %cst_7 : f32 to vector<8x1xf32>
    %14 = arith.mulf %12, %13 : vector<8x1xf32>
    %15 = arith.mulf %11, %11 : vector<8x1xf32>
    %16 = arith.subf %14, %15 : vector<8x1xf32>
    %cst_8 = arith.constant 0.000000e+00 : f32
    %17 = vector.broadcast %cst_8 : f32 to vector<8x1xf32>
    %18 = arith.maximumf %16, %17 : vector<8x1xf32>
    %cst_9 = arith.constant 9.99999974E-6 : f32
    %19 = vector.broadcast %cst_9 : f32 to vector<8x1xf32>
    %20 = arith.addf %18, %19 : vector<8x1xf32>
    %21 = math.rsqrt %20 : vector<8x1xf32>
    %22 = arith.mulf %7, %21 : vector<8x1xf32>
    %23 = arith.mulf %11, %22 : vector<8x1xf32>
    %24 = arith.subf %8, %23 : vector<8x1xf32>
    %25 = arith.extf %4 : vector<8x128xbf16> to vector<8x128xf32>
    %26 = vector.broadcast %22 : vector<8x1xf32> to vector<8x128xf32>
    %27 = arith.mulf %25, %26 : vector<8x128xf32>
    %28 = vector.broadcast %24 : vector<8x1xf32> to vector<8x128xf32>
    %29 = arith.addf %27, %28 : vector<8x128xf32>
    %30 = arith.negf %29 : vector<8x128xf32>
    %31 = math.exp %30 : vector<8x128xf32>
    %cst_10 = arith.constant 1.000000e+00 : f32
    %32 = vector.broadcast %cst_10 : f32 to vector<8x128xf32>
    %33 = arith.addf %32, %31 : vector<8x128xf32>
    %34 = arith.divf %32, %33 : vector<8x128xf32>
    %35 = arith.mulf %29, %34 : vector<8x128xf32>
    %c0_11 = arith.constant 0 : index
    %c0_12 = arith.constant 0 : index
    %36 = vector.load %arg5[%c0_11, %c0_12] : memref<8x8xbf16, #tpu.memory_space<vmem>>, vector<8x8xbf16>
    %37 = arith.truncf %35 : vector<8x128xf32> to vector<8x128xbf16>
    %cst_13 = arith.constant dense<0.000000e+00> : vector<8x128xf32>
    %38 = tpu.matmul %36, %37, %cst_13 {dimension_numbers = #tpu.dot_dimension_numbers<[1], [0], [0], [1], [0, 0, 1, 1], [], []>} : vector<8x8xbf16>, vector<8x128xbf16>, vector<8x128xf32> -> vector<8x128xf32>
    %c0_14 = arith.constant 0 : index
    %c0_15 = arith.constant 0 : index
    %c0_16 = arith.constant 0 : index
    %39 = vector.load %arg6[%c0_14, %c0_15, %c0_16] : memref<1x8x2xf32, #tpu.memory_space<vmem>>, vector<1x8x2xf32>
    %40 = vector.shape_cast %39 : vector<1x8x2xf32> to vector<8x2xf32>
    %cst_17 = arith.constant dense<0.000000e+00> : vector<8xf32>
    %41 = vector.multi_reduction <add>, %38, %cst_17 [1] : vector<8x128xf32> to vector<8xf32>
    %42 = vector.shape_cast %41 : vector<8xf32> to vector<8x1xf32>
    %43 = arith.mulf %38, %38 : vector<8x128xf32>
    %cst_18 = arith.constant dense<0.000000e+00> : vector<8xf32>
    %44 = vector.multi_reduction <add>, %43, %cst_18 [1] : vector<8x128xf32> to vector<8xf32>
    %45 = vector.shape_cast %44 : vector<8xf32> to vector<8x1xf32>
    %46 = tpu.concatenate %42, %45 in 1 : vector<8x1xf32>, vector<8x1xf32> -> vector<8x2xf32>
    %47 = arith.addf %40, %46 : vector<8x2xf32>
    %c0_19 = arith.constant 0 : index
    %c0_20 = arith.constant 0 : index
    %c0_21 = arith.constant 0 : index
    %48 = vector.load %arg6[%c0_19, %c0_20, %c0_21] : memref<1x8x2xf32, #tpu.memory_space<vmem>>, vector<1x8x2xf32>
    %49 = vector.shape_cast %48 : vector<1x8x2xf32> to vector<8x2xf32>
    %50 = vector.shape_cast %47 : vector<8x2xf32> to vector<1x8x2xf32>
    tpu.vector_store %arg6[%c0_19, %c0_20, %c0_21], %50 {strides = array<i32>} : memref<1x8x2xf32, #tpu.memory_space<vmem>>, vector<1x8x2xf32>,
    return
  }
  func.func @transform_0(%arg0: i32, %arg1: i32) -> (i32, i32, i32) {
    %c0_i32 = arith.constant 0 : i32
    %c0_i32_0 = arith.constant 0 : i32
    return %arg0, %c0_i32, %arg1 : i32, i32, i32
  }
  func.func @transform_1(%arg0: i32, %arg1: i32) -> (i32, i32) {
    %c0_i32 = arith.constant 0 : i32
    %c0_i32_0 = arith.constant 0 : i32
    %c0_i32_1 = arith.constant 0 : i32
    return %c0_i32, %c0_i32_0 : i32, i32
  }
  func.func @transform_2(%arg0: i32, %arg1: i32) -> (i32, i32) {
    %c0_i32 = arith.constant 0 : i32
    %c0_i32_0 = arith.constant 0 : i32
    %c0_i32_1 = arith.constant 0 : i32
    return %c0_i32, %c0_i32_0 : i32, i32
  }
  func.func @transform_3(%arg0: i32, %arg1: i32) -> (i32, i32) {
    %c0_i32 = arith.constant 0 : i32
    %c0_i32_0 = arith.constant 0 : i32
    %c0_i32_1 = arith.constant 0 : i32
    return %c0_i32, %c0_i32_0 : i32, i32
  }
  func.func @transform_4(%arg0: i32, %arg1: i32) -> (i32, i32, i32) {
    %c0_i32 = arith.constant 0 : i32
    %c0_i32_0 = arith.constant 0 : i32
    %c0_i32_1 = arith.constant 0 : i32
    return %arg0, %c0_i32, %c0_i32_0 : i32, i32, i32
  }
}

module attributes {stable_mosaic.version = 11 : i64} {
  func.func @_apply_kernel(%arg0: i32, %arg1: i32, %arg2: memref<1x8x128xbf16, #tpu.memory_space<vmem>>, %arg3: memref<8x2xf32, #tpu.memory_space<vmem>>, %arg4: memref<8x2xf32, #tpu.memory_space<vmem>>, %arg5: memref<8x8xbf16, #tpu.memory_space<vmem>>, %arg6: memref<8x2xf32, #tpu.memory_space<vmem>>, %arg7: memref<8x2xf32, #tpu.memory_space<vmem>>, %arg8: memref<1x8x128xf32, #tpu.memory_space<vmem>>) attributes {dimension_semantics = [#tpu.dimension_semantics<parallel>, #tpu.dimension_semantics<parallel>], iteration_bounds = array<i64: 4, 1>, scalar_prefetch = 0 : i64, scratch_operands = 0 : i64, tpu.core_type = #tpu.core_type<tc>, window_params = [{transform_indices = @transform_0, window_bounds = array<i64: 1, 8, 128>}, {pipeline_mode = #tpu.pipeline_mode<synchronous>, transform_indices = @transform_1, window_bounds = array<i64: 8, 2>}, {pipeline_mode = #tpu.pipeline_mode<synchronous>, transform_indices = @transform_2, window_bounds = array<i64: 8, 2>}, {pipeline_mode = #tpu.pipeline_mode<synchronous>, transform_indices = @transform_3, window_bounds = array<i64: 8, 8>}, {pipeline_mode = #tpu.pipeline_mode<synchronous>, transform_indices = @transform_4, window_bounds = array<i64: 8, 2>}, {pipeline_mode = #tpu.pipeline_mode<synchronous>, transform_indices = @transform_5, window_bounds = array<i64: 8, 2>}, {transform_indices = @transform_6, window_bounds = array<i64: 1, 8, 128>}]} {
    %c0 = arith.constant 0 : index
    %c0_0 = arith.constant 0 : index
    %c0_1 = arith.constant 0 : index
    %0 = vector.load %arg2[%c0, %c0_0, %c0_1] : memref<1x8x128xbf16, #tpu.memory_space<vmem>>, vector<1x8x128xbf16>
    %1 = vector.shape_cast %0 : vector<1x8x128xbf16> to vector<8x128xbf16>
    %c0_2 = arith.constant 0 : index
    %c0_3 = arith.constant 0 : index
    %2 = vector.load %arg4[%c0_2, %c0_3] : memref<8x2xf32, #tpu.memory_space<vmem>>, vector<8x2xf32>
    %c0_4 = arith.constant 0 : index
    %c0_5 = arith.constant 0 : index
    %3 = vector.load %arg3[%c0_4, %c0_5] : memref<8x2xf32, #tpu.memory_space<vmem>>, vector<8x2xf32>
    %4 = vector.extract_strided_slice %2 {offsets = [0, 0], sizes = [8, 1], strides = [1, 1]} : vector<8x2xf32> to vector<8x1xf32>
    %5 = vector.extract_strided_slice %2 {offsets = [0, 1], sizes = [8, 1], strides = [1, 1]} : vector<8x2xf32> to vector<8x1xf32>
    %6 = vector.extract_strided_slice %3 {offsets = [0, 0], sizes = [8, 1], strides = [1, 1]} : vector<8x2xf32> to vector<8x1xf32>
    %cst = arith.constant 0.001953125 : f32
    %7 = vector.broadcast %cst : f32 to vector<8x1xf32>
    %8 = arith.mulf %6, %7 : vector<8x1xf32>
    %9 = vector.extract_strided_slice %3 {offsets = [0, 1], sizes = [8, 1], strides = [1, 1]} : vector<8x2xf32> to vector<8x1xf32>
    %cst_6 = arith.constant 0.001953125 : f32
    %10 = vector.broadcast %cst_6 : f32 to vector<8x1xf32>
    %11 = arith.mulf %9, %10 : vector<8x1xf32>
    %12 = arith.mulf %8, %8 : vector<8x1xf32>
    %13 = arith.subf %11, %12 : vector<8x1xf32>
    %cst_7 = arith.constant 0.000000e+00 : f32
    %14 = vector.broadcast %cst_7 : f32 to vector<8x1xf32>
    %15 = arith.maximumf %13, %14 : vector<8x1xf32>
    %cst_8 = arith.constant 9.99999974E-6 : f32
    %16 = vector.broadcast %cst_8 : f32 to vector<8x1xf32>
    %17 = arith.addf %15, %16 : vector<8x1xf32>
    %18 = math.rsqrt %17 : vector<8x1xf32>
    %19 = arith.mulf %4, %18 : vector<8x1xf32>
    %20 = arith.mulf %8, %19 : vector<8x1xf32>
    %21 = arith.subf %5, %20 : vector<8x1xf32>
    %22 = arith.extf %1 : vector<8x128xbf16> to vector<8x128xf32>
    %23 = vector.broadcast %19 : vector<8x1xf32> to vector<8x128xf32>
    %24 = arith.mulf %22, %23 : vector<8x128xf32>
    %25 = vector.broadcast %21 : vector<8x1xf32> to vector<8x128xf32>
    %26 = arith.addf %24, %25 : vector<8x128xf32>
    %27 = arith.negf %26 : vector<8x128xf32>
    %28 = math.exp %27 : vector<8x128xf32>
    %cst_9 = arith.constant 1.000000e+00 : f32
    %29 = vector.broadcast %cst_9 : f32 to vector<8x128xf32>
    %30 = arith.addf %29, %28 : vector<8x128xf32>
    %31 = arith.divf %29, %30 : vector<8x128xf32>
    %32 = arith.mulf %26, %31 : vector<8x128xf32>
    %c0_10 = arith.constant 0 : index
    %c0_11 = arith.constant 0 : index
    %33 = vector.load %arg5[%c0_10, %c0_11] : memref<8x8xbf16, #tpu.memory_space<vmem>>, vector<8x8xbf16>
    %34 = arith.truncf %32 : vector<8x128xf32> to vector<8x128xbf16>
    %cst_12 = arith.constant dense<0.000000e+00> : vector<8x128xf32>
    %35 = tpu.matmul %33, %34, %cst_12 {dimension_numbers = #tpu.dot_dimension_numbers<[1], [0], [0], [1], [0, 0, 1, 1], [], []>} : vector<8x8xbf16>, vector<8x128xbf16>, vector<8x128xf32> -> vector<8x128xf32>
    %c0_13 = arith.constant 0 : index
    %c0_14 = arith.constant 0 : index
    %36 = vector.load %arg7[%c0_13, %c0_14] : memref<8x2xf32, #tpu.memory_space<vmem>>, vector<8x2xf32>
    %c0_15 = arith.constant 0 : index
    %c0_16 = arith.constant 0 : index
    %37 = vector.load %arg6[%c0_15, %c0_16] : memref<8x2xf32, #tpu.memory_space<vmem>>, vector<8x2xf32>
    %38 = vector.extract_strided_slice %36 {offsets = [0, 0], sizes = [8, 1], strides = [1, 1]} : vector<8x2xf32> to vector<8x1xf32>
    %39 = vector.extract_strided_slice %36 {offsets = [0, 1], sizes = [8, 1], strides = [1, 1]} : vector<8x2xf32> to vector<8x1xf32>
    %40 = vector.extract_strided_slice %37 {offsets = [0, 0], sizes = [8, 1], strides = [1, 1]} : vector<8x2xf32> to vector<8x1xf32>
    %cst_17 = arith.constant 0.001953125 : f32
    %41 = vector.broadcast %cst_17 : f32 to vector<8x1xf32>
    %42 = arith.mulf %40, %41 : vector<8x1xf32>
    %43 = vector.extract_strided_slice %37 {offsets = [0, 1], sizes = [8, 1], strides = [1, 1]} : vector<8x2xf32> to vector<8x1xf32>
    %cst_18 = arith.constant 0.001953125 : f32
    %44 = vector.broadcast %cst_18 : f32 to vector<8x1xf32>
    %45 = arith.mulf %43, %44 : vector<8x1xf32>
    %46 = arith.mulf %42, %42 : vector<8x1xf32>
    %47 = arith.subf %45, %46 : vector<8x1xf32>
    %cst_19 = arith.constant 0.000000e+00 : f32
    %48 = vector.broadcast %cst_19 : f32 to vector<8x1xf32>
    %49 = arith.maximumf %47, %48 : vector<8x1xf32>
    %cst_20 = arith.constant 9.99999974E-6 : f32
    %50 = vector.broadcast %cst_20 : f32 to vector<8x1xf32>
    %51 = arith.addf %49, %50 : vector<8x1xf32>
    %52 = math.rsqrt %51 : vector<8x1xf32>
    %53 = arith.mulf %38, %52 : vector<8x1xf32>
    %54 = arith.mulf %42, %53 : vector<8x1xf32>
    %55 = arith.subf %39, %54 : vector<8x1xf32>
    %56 = vector.broadcast %53 : vector<8x1xf32> to vector<8x128xf32>
    %57 = arith.mulf %35, %56 : vector<8x128xf32>
    %58 = vector.broadcast %55 : vector<8x1xf32> to vector<8x128xf32>
    %59 = arith.addf %57, %58 : vector<8x128xf32>
    %60 = arith.negf %59 : vector<8x128xf32>
    %61 = math.exp %60 : vector<8x128xf32>
    %cst_21 = arith.constant 1.000000e+00 : f32
    %62 = vector.broadcast %cst_21 : f32 to vector<8x128xf32>
    %63 = arith.addf %62, %61 : vector<8x128xf32>
    %64 = arith.divf %62, %63 : vector<8x128xf32>
    %65 = arith.mulf %59, %64 : vector<8x128xf32>
    %c0_22 = arith.constant 0 : index
    %c0_23 = arith.constant 0 : index
    %c0_24 = arith.constant 0 : index
    %66 = vector.load %arg8[%c0_22, %c0_23, %c0_24] : memref<1x8x128xf32, #tpu.memory_space<vmem>>, vector<1x8x128xf32>
    %67 = vector.shape_cast %66 : vector<1x8x128xf32> to vector<8x128xf32>
    %68 = vector.shape_cast %65 : vector<8x128xf32> to vector<1x8x128xf32>
    tpu.vector_store %arg8[%c0_22, %c0_23, %c0_24], %68 {strides = array<i32>} : memref<1x8x128xf32, #tpu.memory_space<vmem>>, vector<1x8x128xf32>,
    return
  }
  func.func @transform_0(%arg0: i32, %arg1: i32) -> (i32, i32, i32) {
    %c0_i32 = arith.constant 0 : i32
    %c0_i32_0 = arith.constant 0 : i32
    return %arg0, %c0_i32, %arg1 : i32, i32, i32
  }
  func.func @transform_1(%arg0: i32, %arg1: i32) -> (i32, i32) {
    %c0_i32 = arith.constant 0 : i32
    %c0_i32_0 = arith.constant 0 : i32
    %c0_i32_1 = arith.constant 0 : i32
    return %c0_i32, %c0_i32_0 : i32, i32
  }
  func.func @transform_2(%arg0: i32, %arg1: i32) -> (i32, i32) {
    %c0_i32 = arith.constant 0 : i32
    %c0_i32_0 = arith.constant 0 : i32
    %c0_i32_1 = arith.constant 0 : i32
    return %c0_i32, %c0_i32_0 : i32, i32
  }
  func.func @transform_3(%arg0: i32, %arg1: i32) -> (i32, i32) {
    %c0_i32 = arith.constant 0 : i32
    %c0_i32_0 = arith.constant 0 : i32
    %c0_i32_1 = arith.constant 0 : i32
    return %c0_i32, %c0_i32_0 : i32, i32
  }
  func.func @transform_4(%arg0: i32, %arg1: i32) -> (i32, i32) {
    %c0_i32 = arith.constant 0 : i32
    %c0_i32_0 = arith.constant 0 : i32
    %c0_i32_1 = arith.constant 0 : i32
    return %c0_i32, %c0_i32_0 : i32, i32
  }
  func.func @transform_5(%arg0: i32, %arg1: i32) -> (i32, i32) {
    %c0_i32 = arith.constant 0 : i32
    %c0_i32_0 = arith.constant 0 : i32
    %c0_i32_1 = arith.constant 0 : i32
    return %c0_i32, %c0_i32_0 : i32, i32
  }
  func.func @transform_6(%arg0: i32, %arg1: i32) -> (i32, i32, i32) {
    %c0_i32 = arith.constant 0 : i32
    %c0_i32_0 = arith.constant 0 : i32
    return %arg0, %c0_i32, %arg1 : i32, i32, i32
  }
}

</mosaic_0001>

<llo_original>
// kernel: depthwise_separable_conv1d.3
$region0: #{depthwise_separable_conv1d.3}
  #allocation0 [shape = 'u32[]', space=smem, size = 0x4, offset = 0x4, fixed_abs, tag = 'smem constant byte address 0x4 - core index']
  #allocation1 [shape = 'u32[144,128]{1,0:T(1,128)}', space=vmem, size = 0x12000, scoped, tag = 'internal scratch']
  %s0 = inlined_call_operand.vmem [shape: f32[4,8,130], index: 0, kind: input, shape index: {}]
  %s1 = inlined_call_operand.vmem [shape: f32[8,3], index: 1, kind: input, shape index: {}]
  %s2 = inlined_call_operand.vmem [shape: bf16[4,8,128], index: 2, kind: output, shape index: {0}]
  %s3 = inlined_call_operand.vmem [shape: f32[4,8,2], index: 3, kind: output, shape index: {1}]
  %4 = xla_tuple %s2, %s3
  %s5 = sld [smem:[#allocation0]]
  $region49: #{depthwise_separable_conv1d.3} parent=0
    _
  %s7 = ssub.s32 1, %s5
  %s8 = scalar_select 0, %s7, %s5
  loop: start=0, step=1, limit=6
  $region2: #{depthwise_separable_conv1d.3} parent=0 // loop_pre_header
    _
  $region3: #{depthwise_separable_conv1d.3} parent=0 // loop_header
    %s10 = sphi 0, %s14
    %p11 = scmp.ge.s32.totalorder %s10, 6
    %s17 = sphi 0, %s29
    %s18 = sphi 0, %s25
    %s19 = sphi 0, %s17
    %s20 = sphi 0, %s18
    %s21 = sphi 0, %s19
    %s22 = sphi 0, %s20
    %s34 = sphi 0, %s36
    %s37 = sphi 0, %s34
    %s38 = sphi 0, %s37
    %s54 = sphi 0, %s38
    %s60 = sphi 0, %s62
    %s63 = sphi 0, %s60
    %s64 = sphi 0, %s63
    %s80 = sphi 0, %s64
    %s88 = sphi 0, %s90
    %s91 = sphi 0, %s88
    %s92 = sphi 0, %s91
    %s108 = sphi 0, %s92
    %s116 = sphi 0, %s118
    %s119 = sphi 0, %s116
    %s120 = sphi 0, %s119
    %s136 = sphi 0, %s120
  $region4: #{depthwise_separable_conv1d.3} parent=0 // loop_header_branch
    %13 = sbr.rel (%p11) target = $region8
  $region5: #{depthwise_separable_conv1d.3} parent=0 // loop_body
    %s15 = ssub.s32 %s10, 1
    %s16 = ssub.s32 %s10, 2
    %s23 = sadd.s32 1, %s18
    %p24 = scmp.ge.s32.totalorder %s23, 4
    %s25 = scalar_select %p24, 0, %s23
    %s26 = sadd.s32 1, %s17
    %s27 = scalar_select %p24, %s26, %s17
    %p28 = scmp.ge.s32.totalorder %s27, 1
    %s29 = scalar_select %p28, 0, %s27
    %s30 = ssub.s32 %s18, %s25
    %s31 = ssub.s32 %s17, %s29
    %s32 = sor.u32 %s30, %s31
    %p33 = scmp.eq.s32.totalorder %s32, 0
    %s35 = sadd.s32 %s34, 1
    %s36 = scalar_select %p33, %s34, %s35
    %p39 = pneg %p33
    %p40 = scmp.eq.s32.totalorder %s10, 3
    %p41 = por %p39, %p40
    %p42 = scmp.ne.s32.totalorder %s34, %s37
    %p43 = scmp.eq.s32.totalorder %s10, 0
    %p44 = por %p42, %p43
    %p45 = scmp.ne.s32.totalorder %s34, %s37
    %p46 = scmp.eq.s32.totalorder %s15, 3
    %p47 = por %p45, %p46
    %p48 = scmp.ne.s32.totalorder %s37, %s38
    %p49 = scmp.eq.s32.totalorder %s15, 0
    %p50 = por %p48, %p49
    %p51 = scmp.ne.s32.totalorder %s37, %s38
    %p52 = scmp.eq.s32.totalorder %s16, 3
    %p53 = por %p51, %p52
    %p55 = scmp.ne.s32.totalorder %s38, %s54
    %p56 = scmp.eq.s32.totalorder %s16, 0
    %p57 = por %p55, %p56
    %s58 = ssub.s32 %s17, %s29
    %p59 = scmp.eq.s32.totalorder %s58, 0
    %s61 = sadd.s32 %s60, 1
    %s62 = scalar_select %p59, %s60, %s61
    %p65 = pneg %p59
    %p66 = scmp.eq.s32.totalorder %s10, 3
    %p67 = por %p65, %p66
    %p68 = scmp.ne.s32.totalorder %s60, %s63
    %p69 = scmp.eq.s32.totalorder %s10, 0
    %p70 = por %p68, %p69
    %p71 = scmp.ne.s32.totalorder %s60, %s63
    %p72 = scmp.eq.s32.totalorder %s15, 3
    %p73 = por %p71, %p72
    %p74 = scmp.ne.s32.totalorder %s63, %s64
    %p75 = scmp.eq.s32.totalorder %s15, 0
    %p76 = por %p74, %p75
    %p77 = scmp.ne.s32.totalorder %s63, %s64
    %p78 = scmp.eq.s32.totalorder %s16, 3
    %p79 = por %p77, %p78
    %p81 = scmp.ne.s32.totalorder %s64, %s80
    %p82 = scmp.eq.s32.totalorder %s16, 0
    %p83 = por %p81, %p82
    %s84 = ssub.s32 %s18, %s25
    %s85 = ssub.s32 %s17, %s29
    %s86 = sor.u32 %s84, %s85
    %p87 = scmp.eq.s32.totalorder %s86, 0
    %s89 = sadd.s32 %s88, 1
    %s90 = scalar_select %p87, %s88, %s89
    %p93 = pneg %p87
    %p94 = scmp.eq.s32.totalorder %s10, 3
    %p95 = por %p93, %p94
    %p96 = scmp.ne.s32.totalorder %s88, %s91
    %p97 = scmp.eq.s32.totalorder %s10, 0
    %p98 = por %p96, %p97
    %p99 = scmp.ne.s32.totalorder %s88, %s91
    %p100 = scmp.eq.s32.totalorder %s15, 3
    %p101 = por %p99, %p100
    %p102 = scmp.ne.s32.totalorder %s91, %s92
    %p103 = scmp.eq.s32.totalorder %s15, 0
    %p104 = por %p102, %p103
    %p105 = scmp.ne.s32.totalorder %s91, %s92
    %p106 = scmp.eq.s32.totalorder %s16, 3
    %p107 = por %p105, %p106
    %p109 = scmp.ne.s32.totalorder %s92, %s108
    %p110 = scmp.eq.s32.totalorder %s16, 0
    %p111 = por %p109, %p110
    %s112 = ssub.s32 %s18, %s25
    %s113 = ssub.s32 %s17, %s29
    %s114 = sor.u32 %s112, %s113
    %p115 = scmp.eq.s32.totalorder %s114, 0
    %s117 = sadd.s32 %s116, 1
    %s118 = scalar_select %p115, %s116, %s117
    %p121 = pneg %p115
    %p122 = scmp.eq.s32.totalorder %s10, 3
    %p123 = por %p121, %p122
    %p124 = scmp.ne.s32.totalorder %s116, %s119
    %p125 = scmp.eq.s32.totalorder %s10, 0
    %p126 = por %p124, %p125
    %p127 = scmp.ne.s32.totalorder %s116, %s119
    %p128 = scmp.eq.s32.totalorder %s15, 3
    %p129 = por %p127, %p128
    %p130 = scmp.ne.s32.totalorder %s119, %s120
    %p131 = scmp.eq.s32.totalorder %s15, 0
    %p132 = por %p130, %p131
    %p133 = scmp.ne.s32.totalorder %s119, %s120
    %p134 = scmp.eq.s32.totalorder %s16, 3
    %p135 = por %p133, %p134
    %p137 = scmp.ne.s32.totalorder %s120, %s136
    %p138 = scmp.eq.s32.totalorder %s16, 0
    %p139 = por %p137, %p138
    %p140 = scmp.le.s32.totalorder 1, %s10
    %p141 = scmp.lt.s32.totalorder %s10, 5
    %p142 = pnand %p140, %p141
    %p143 = pneg %p142
    // Predicated region
    $region9: #{depthwise_separable_conv1d.3} parent=5 // pred_check
      _
    $region10: #{depthwise_separable_conv1d.3} parent=5 // pred_check_branch
      %145 = sbr.rel (%p142) target = $region12
    $region11: #{depthwise_separable_conv1d.3} parent=5 // pred_region
      %s146 = ssub.s32 %s10, 1
      // Predicated region
      $region13: #{depthwise_separable_conv1d.3} parent=11 // pred_check
        %p147 = pneg %p76
      $region14: #{depthwise_separable_conv1d.3} parent=11 // pred_check_branch
        %149 = sbr.rel (%p147) target = $region16
      $region15: #{depthwise_separable_conv1d.3} parent=11 // pred_region
        %p150 = scmp.lt.s32.totalorder %s19, 0
        %s151 = scalar_select %p150, %s19, 0
        %s152 = smul.addr %s151, 8
        %s153 = scalar_lea.vmem %s1, %s152
      $region16: #{depthwise_separable_conv1d.3} parent=11 // pred_fallthru
        _
    $region12: #{depthwise_separable_conv1d.3} parent=5 // pred_fallthru
      _
    %p154 = scmp.lt.s32.totalorder %s10, 4
    // Predicated region
    $region17: #{depthwise_separable_conv1d.3} parent=5 // pred_check
      %p155 = pneg %p154
    $region18: #{depthwise_separable_conv1d.3} parent=5 // pred_check_branch
      %157 = sbr.rel (%p155) target = $region20
    $region19: #{depthwise_separable_conv1d.3} parent=5 // pred_region
      // Predicated region
      $region21: #{depthwise_separable_conv1d.3} parent=19 // pred_check
        %p158 = pneg %p44
      $region22: #{depthwise_separable_conv1d.3} parent=19 // pred_check_branch
        %160 = sbr.rel (%p158) target = $region24
      $region23: #{depthwise_separable_conv1d.3} parent=19 // pred_region
        %p161 = scmp.lt.s32.totalorder %s18, 3
        %s162 = scalar_select %p161, %s18, 3
        %p163 = scmp.lt.s32.totalorder %s17, 0
        %s164 = scalar_select %p163, %s17, 0
        %s165 = smul.addr %s164, 2
        %s166 = smul.addr %s162, 2
        %s167 = sadd.s32 %s165, %s166
        %s168 = smul.addr %s167, 8
        %s169 = scalar_lea.vmem %s0, %s168
      $region24: #{depthwise_separable_conv1d.3} parent=19 // pred_fallthru
        _
    $region20: #{depthwise_separable_conv1d.3} parent=5 // pred_fallthru
      _
    %p170 = scmp.le.s32.totalorder 1, %s10
    %p171 = scmp.lt.s32.totalorder %s10, 5
    %p172 = pnand %p170, %p171
    %p173 = pneg %p172
    // Predicated region
    $region25: #{depthwise_separable_conv1d.3} parent=5 // pred_check
      _
    $region26: #{depthwise_separable_conv1d.3} parent=5 // pred_check_branch
      %175 = sbr.rel (%p172) target = $region28
    $region27: #{depthwise_separable_conv1d.3} parent=5 // pred_region
      %s176 = ssub.s32 %s10, 1
      %p177 = scmp.lt.s32.totalorder %s20, 3
      %s178 = scalar_select %p177, %s20, 3
      %p179 = scmp.lt.s32.totalorder %s19, 0
      %s180 = scalar_select %p179, %s19, 0
      %s181 = smul.addr %s180, 2
      %s182 = smul.addr %s178, 2
      %s183 = sadd.s32 %s181, %s182
      %s184 = smul.addr %s183, 8
      %s185 = scalar_lea.vmem %s0, %s184
      %p186 = pneg %p50
      %p187 = pneg %p47
      %p188 = scmp.lt.s32.totalorder %s19, 0
      %s189 = scalar_select %p188, %s19, 0
      %s190 = smul.addr %s189, 8
      %s191 = scalar_lea.vmem %s1, %s190
      %p192 = pneg %p76
      %p193 = pneg %p73
      %p194 = pneg %p104
      %p195 = pneg %p101
      %p196 = scmp.lt.s32.totalorder %s20, 3
      %s197 = scalar_select %p196, %s20, 3
      %p198 = scmp.lt.s32.totalorder %s19, 0
      %s199 = scalar_select %p198, %s19, 0
      %s200 = sadd.s32 %s199, %s197
      %s201 = smul.addr %s200, 4
      %s202 = scalar_lea.vmem %s2, %s201
      %p203 = pneg %p132
      %p204 = pneg %p129
      %p205 = scmp.lt.s32.totalorder %s20, 3
      %s206 = scalar_select %p205, %s20, 3
      %p207 = scmp.lt.s32.totalorder %s19, 0
      %s208 = scalar_select %p207, %s19, 0
      %s209 = sadd.s32 %s208, %s206
      %s210 = smul.addr %s209, 8
      %s211 = scalar_lea.vmem %s3, %s210
      %p212 = scmp.lt.s32.totalorder %s20, 3
      %s213 = scalar_select %p212, %s20, 3
      %p214 = scmp.lt.s32.totalorder %s19, 0
      %s215 = scalar_select %p214, %s19, 0
      %s216 = smul.addr %s215, 2
      %s217 = smul.addr %s213, 2
      %s218 = sadd.s32 %s216, %s217
      %s219 = smul.addr %s218, 8
      %s220 = scalar_lea.vmem %s0, %s219
      %p221 = scmp.lt.s32.totalorder %s19, 0
      %s222 = scalar_select %p221, %s19, 0
      %s223 = smul.addr %s222, 8
      %s224 = scalar_lea.vmem %s1, %s223
      %p225 = scmp.lt.s32.totalorder %s20, 3
      %s226 = scalar_select %p225, %s20, 3
      %p227 = scmp.lt.s32.totalorder %s19, 0
      %s228 = scalar_select %p227, %s19, 0
      %s229 = sadd.s32 %s228, %s226
      %s230 = smul.addr %s229, 4
      %s231 = scalar_lea.vmem %s2, %s230
      %p232 = scmp.lt.s32.totalorder %s20, 3
      %s233 = scalar_select %p232, %s20, 3
      %p234 = scmp.lt.s32.totalorder %s19, 0
      %s235 = scalar_select %p234, %s19, 0
      %s236 = sadd.s32 %s235, %s233
      %s237 = smul.addr %s236, 8
      %s238 = scalar_lea.vmem %s3, %s237
      %v239 = vld [vmem:[%s220] sm:$0xff]
      %v240 = vld [vmem:[%s220 + $0x8] sm:$0xff]
      %v241 = vld [vmem:[%s224] sm:$0xff]
      %243 = vset.pattern.permute.xlu0 0
      %244 = vperm.xlu0 %243, %v241
      %v245 = vpop.permute.xlu0 %244
      %v247 = vmul.f32 %v239, %v245
      %v248 = vadd.f32 %v247, 0.0
      %249 = vset.pattern.permute.xlu0 1
      %250 = vperm.xlu0 %249, %v241
      %v251 = vpop.permute.xlu0 %250
      %v253 = vmul.f32 %v239, %v251
      %v254 = vmul.f32 %v240, %v251
      %257 = vrot.lane.b32.xlu0 %v253, 127
      %v258 = vpop.permute.xlu0 %257
      %259 = vrot.lane.b32.xlu0 %v254, 127
      %v260 = vpop.permute.xlu0 %259
      %vm261 = vcmask 1039360
      %v262 = vsel %vm261, %v258, %v260
      %v264 = vadd.f32 %v248, %v262
      %265 = vset.pattern.permute.xlu0 2
      %266 = vperm.xlu0 %265, %v241
      %v267 = vpop.permute.xlu0 %266
      %v269 = vmul.f32 %v239, %v267
      %v270 = vmul.f32 %v240, %v267
      %273 = vrot.lane.b32.xlu0 %v269, 126
      %v274 = vpop.permute.xlu0 %273
      %275 = vrot.lane.b32.xlu0 %v270, 126
      %v276 = vpop.permute.xlu0 %275
      %vm277 = vcmask 1031168
      %v278 = vsel %vm277, %v274, %v276
      %v280 = vadd.f32 %v264, %v278
      %v281 = vpack.c.bf16 %v280, %v280
      %282 = vst [vmem:[%s231] sm:$0xf] %v281
      %283 = vadd.xlane.f32.xlu0 %v280
      %v284 = vpop.xlane.xlu0 %283
      %v285 = vmul.f32 %v280, %v280
      %286 = vadd.xlane.f32.xlu0 %v285
      %v287 = vpop.xlane.xlu0 %286
      %vm288 = vcmask 7168
      %v289 = vsel %vm288, %v284, %v287
      %vm290 = vcmask 15360
      %291 = vst.msk [vmem:[%s238] sm:$0xff] %vm290, %v289
      %p292 = scmp.lt.s32.totalorder %s20, 3
      %s293 = scalar_select %p292, %s20, 3
      %p294 = scmp.lt.s32.totalorder %s19, 0
      %s295 = scalar_select %p294, %s19, 0
      %s296 = sadd.s32 %s295, %s293
      %s297 = smul.addr %s296, 4
      %s298 = scalar_lea.vmem %s2, %s297
      %p299 = scmp.lt.s32.totalorder %s20, 3
      %s300 = scalar_select %p299, %s20, 3
      %p301 = scmp.lt.s32.totalorder %s19, 0
      %s302 = scalar_select %p301, %s19, 0
      %s303 = sadd.s32 %s302, %s300
      %s304 = smul.addr %s303, 8
      %s305 = scalar_lea.vmem %s3, %s304
      // Predicated region
      $region29: #{depthwise_separable_conv1d.3} parent=27 // pred_check
        %p306 = pneg %p101
      $region30: #{depthwise_separable_conv1d.3} parent=27 // pred_check_branch
        %308 = sbr.rel (%p306) target = $region32
      $region31: #{depthwise_separable_conv1d.3} parent=27 // pred_region
        _
      $region32: #{depthwise_separable_conv1d.3} parent=27 // pred_fallthru
        _
      // Predicated region
      $region33: #{depthwise_separable_conv1d.3} parent=27 // pred_check
        %p309 = pneg %p129
      $region34: #{depthwise_separable_conv1d.3} parent=27 // pred_check_branch
        %311 = sbr.rel (%p309) target = $region36
      $region35: #{depthwise_separable_conv1d.3} parent=27 // pred_region
        _
      $region36: #{depthwise_separable_conv1d.3} parent=27 // pred_fallthru
        _
    $region28: #{depthwise_separable_conv1d.3} parent=5 // pred_fallthru
      _
    %p312 = scmp.le.s32.totalorder 2, %s10
    // Predicated region
    $region37: #{depthwise_separable_conv1d.3} parent=5 // pred_check
      %p313 = pneg %p312
    $region38: #{depthwise_separable_conv1d.3} parent=5 // pred_check_branch
      %315 = sbr.rel (%p313) target = $region40
    $region39: #{depthwise_separable_conv1d.3} parent=5 // pred_region
      %s316 = ssub.s32 %s10, 2
      // Predicated region
      $region41: #{depthwise_separable_conv1d.3} parent=39 // pred_check
        %p317 = pneg %p107
      $region42: #{depthwise_separable_conv1d.3} parent=39 // pred_check_branch
        %319 = sbr.rel (%p317) target = $region44
      $region43: #{depthwise_separable_conv1d.3} parent=39 // pred_region
        %p320 = scmp.lt.s32.totalorder %s22, 3
        %s321 = scalar_select %p320, %s22, 3
        %p322 = scmp.lt.s32.totalorder %s21, 0
        %s323 = scalar_select %p322, %s21, 0
        %s324 = sadd.s32 %s323, %s321
        %s325 = smul.addr %s324, 4
        %s326 = scalar_lea.vmem %s2, %s325
      $region44: #{depthwise_separable_conv1d.3} parent=39 // pred_fallthru
        _
      // Predicated region
      $region45: #{depthwise_separable_conv1d.3} parent=39 // pred_check
        %p327 = pneg %p135
      $region46: #{depthwise_separable_conv1d.3} parent=39 // pred_check_branch
        %329 = sbr.rel (%p327) target = $region48
      $region47: #{depthwise_separable_conv1d.3} parent=39 // pred_region
        %p330 = scmp.lt.s32.totalorder %s22, 3
        %s331 = scalar_select %p330, %s22, 3
        %p332 = scmp.lt.s32.totalorder %s21, 0
        %s333 = scalar_select %p332, %s21, 0
        %s334 = sadd.s32 %s333, %s331
        %s335 = smul.addr %s334, 8
        %s336 = scalar_lea.vmem %s3, %s335
      $region48: #{depthwise_separable_conv1d.3} parent=39 // pred_fallthru
        _
    $region40: #{depthwise_separable_conv1d.3} parent=5 // pred_fallthru
      _
  $region6: #{depthwise_separable_conv1d.3} parent=0 // loop_footer
    %s14 = sadd.s32 1, %s10
  $region7: #{depthwise_separable_conv1d.3} parent=0 // loop_footer_branch
    %9 = sbr.rel target = $region3
  $region8: #{depthwise_separable_conv1d.3} parent=0 // loop_exit
    _

// kernel: depthwise_separable_conv1d.4
$region0: #{depthwise_separable_conv1d.4}
  #allocation0 [shape = 'u32[]', space=smem, size = 0x4, offset = 0x4, fixed_abs, tag = 'smem constant byte address 0x4 - core index']
  #allocation1 [shape = 'u32[144,128]{1,0:T(1,128)}', space=vmem, size = 0x12000, scoped, tag = 'internal scratch']
  %s0 = inlined_call_operand.vmem [shape: bf16[4,8,128], index: 0, kind: input, shape index: {}]
  %s1 = inlined_call_operand.vmem [shape: f32[8,2], index: 1, kind: input, shape index: {}]
  %s2 = inlined_call_operand.vmem [shape: f32[8,2], index: 2, kind: input, shape index: {}]
  %s3 = inlined_call_operand.vmem [shape: bf16[8,8], index: 3, kind: input, shape index: {}]
  %s4 = inlined_call_operand.vmem [shape: f32[4,8,2], index: 4, kind: output, shape index: {}]
  %s5 = sld [smem:[#allocation0]]
  $region53: #{depthwise_separable_conv1d.4} parent=0
    _
  %s7 = ssub.s32 1, %s5
  %s8 = scalar_select 0, %s7, %s5
  loop: start=0, step=1, limit=6
  $region2: #{depthwise_separable_conv1d.4} parent=0 // loop_pre_header
    _
  $region3: #{depthwise_separable_conv1d.4} parent=0 // loop_header
    %s10 = sphi 0, %s14
    %p11 = scmp.ge.s32.totalorder %s10, 6
    %s17 = sphi 0, %s29
    %s18 = sphi 0, %s25
    %s19 = sphi 0, %s17
    %s20 = sphi 0, %s18
    %s21 = sphi 0, %s19
    %s22 = sphi 0, %s20
    %s34 = sphi 0, %s36
    %s37 = sphi 0, %s34
    %s38 = sphi 0, %s37
    %s54 = sphi 0, %s38
    %s58 = sphi 0, %s58
    %s60 = sphi 0, %s58
    %s61 = sphi 0, %s60
    %s75 = sphi 0, %s61
    %s79 = sphi 0, %s79
    %s81 = sphi 0, %s79
    %s82 = sphi 0, %s81
    %s96 = sphi 0, %s82
    %s100 = sphi 0, %s100
    %s102 = sphi 0, %s100
    %s103 = sphi 0, %s102
    %s117 = sphi 0, %s103
    %s123 = sphi 0, %s125
    %s126 = sphi 0, %s123
    %s127 = sphi 0, %s126
    %s143 = sphi 0, %s127
  $region4: #{depthwise_separable_conv1d.4} parent=0 // loop_header_branch
    %13 = sbr.rel (%p11) target = $region8
  $region5: #{depthwise_separable_conv1d.4} parent=0 // loop_body
    %s15 = ssub.s32 %s10, 1
    %s16 = ssub.s32 %s10, 2
    %s23 = sadd.s32 1, %s18
    %p24 = scmp.ge.s32.totalorder %s23, 1
    %s25 = scalar_select %p24, 0, %s23
    %s26 = sadd.s32 1, %s17
    %s27 = scalar_select %p24, %s26, %s17
    %p28 = scmp.ge.s32.totalorder %s27, 4
    %s29 = scalar_select %p28, 0, %s27
    %s30 = ssub.s32 %s17, %s29
    %s31 = ssub.s32 %s18, %s25
    %s32 = sor.u32 %s30, %s31
    %p33 = scmp.eq.s32.totalorder %s32, 0
    %s35 = sadd.s32 %s34, 1
    %s36 = scalar_select %p33, %s34, %s35
    %p39 = pneg %p33
    %p40 = scmp.eq.s32.totalorder %s10, 3
    %p41 = por %p39, %p40
    %p42 = scmp.ne.s32.totalorder %s34, %s37
    %p43 = scmp.eq.s32.totalorder %s10, 0
    %p44 = por %p42, %p43
    %p45 = scmp.ne.s32.totalorder %s34, %s37
    %p46 = scmp.eq.s32.totalorder %s15, 3
    %p47 = por %p45, %p46
    %p48 = scmp.ne.s32.totalorder %s37, %s38
    %p49 = scmp.eq.s32.totalorder %s15, 0
    %p50 = por %p48, %p49
    %p51 = scmp.ne.s32.totalorder %s37, %s38
    %p52 = scmp.eq.s32.totalorder %s16, 3
    %p53 = por %p51, %p52
    %p55 = scmp.ne.s32.totalorder %s38, %s54
    %p56 = scmp.eq.s32.totalorder %s16, 0
    %p57 = por %p55, %p56
    %s59 = sadd.s32 %s58, 1
    %p62 = scmp.eq.s32.totalorder %s10, 3
    %p63 = scmp.ne.s32.totalorder %s58, %s60
    %p64 = scmp.eq.s32.totalorder %s10, 0
    %p65 = por %p63, %p64
    %p66 = scmp.ne.s32.totalorder %s58, %s60
    %p67 = scmp.eq.s32.totalorder %s15, 3
    %p68 = por %p66, %p67
    %p69 = scmp.ne.s32.totalorder %s60, %s61
    %p70 = scmp.eq.s32.totalorder %s15, 0
    %p71 = por %p69, %p70
    %p72 = scmp.ne.s32.totalorder %s60, %s61
    %p73 = scmp.eq.s32.totalorder %s16, 3
    %p74 = por %p72, %p73
    %p76 = scmp.ne.s32.totalorder %s61, %s75
    %p77 = scmp.eq.s32.totalorder %s16, 0
    %p78 = por %p76, %p77
    %s80 = sadd.s32 %s79, 1
    %p83 = scmp.eq.s32.totalorder %s10, 3
    %p84 = scmp.ne.s32.totalorder %s79, %s81
    %p85 = scmp.eq.s32.totalorder %s10, 0
    %p86 = por %p84, %p85
    %p87 = scmp.ne.s32.totalorder %s79, %s81
    %p88 = scmp.eq.s32.totalorder %s15, 3
    %p89 = por %p87, %p88
    %p90 = scmp.ne.s32.totalorder %s81, %s82
    %p91 = scmp.eq.s32.totalorder %s15, 0
    %p92 = por %p90, %p91
    %p93 = scmp.ne.s32.totalorder %s81, %s82
    %p94 = scmp.eq.s32.totalorder %s16, 3
    %p95 = por %p93, %p94
    %p97 = scmp.ne.s32.totalorder %s82, %s96
    %p98 = scmp.eq.s32.totalorder %s16, 0
    %p99 = por %p97, %p98
    %s101 = sadd.s32 %s100, 1
    %p104 = scmp.eq.s32.totalorder %s10, 3
    %p105 = scmp.ne.s32.totalorder %s100, %s102
    %p106 = scmp.eq.s32.totalorder %s10, 0
    %p107 = por %p105, %p106
    %p108 = scmp.ne.s32.totalorder %s100, %s102
    %p109 = scmp.eq.s32.totalorder %s15, 3
    %p110 = por %p108, %p109
    %p111 = scmp.ne.s32.totalorder %s102, %s103
    %p112 = scmp.eq.s32.totalorder %s15, 0
    %p113 = por %p111, %p112
    %p114 = scmp.ne.s32.totalorder %s102, %s103
    %p115 = scmp.eq.s32.totalorder %s16, 3
    %p116 = por %p114, %p115
    %p118 = scmp.ne.s32.totalorder %s103, %s117
    %p119 = scmp.eq.s32.totalorder %s16, 0
    %p120 = por %p118, %p119
    %s121 = ssub.s32 %s17, %s29
    %p122 = scmp.eq.s32.totalorder %s121, 0
    %s124 = sadd.s32 %s123, 1
    %s125 = scalar_select %p122, %s123, %s124
    %p128 = pneg %p122
    %p129 = scmp.eq.s32.totalorder %s10, 3
    %p130 = por %p128, %p129
    %p131 = scmp.ne.s32.totalorder %s123, %s126
    %p132 = scmp.eq.s32.totalorder %s10, 0
    %p133 = por %p131, %p132
    %p134 = scmp.ne.s32.totalorder %s123, %s126
    %p135 = scmp.eq.s32.totalorder %s15, 3
    %p136 = por %p134, %p135
    %p137 = scmp.ne.s32.totalorder %s126, %s127
    %p138 = scmp.eq.s32.totalorder %s15, 0
    %p139 = por %p137, %p138
    %p140 = scmp.ne.s32.totalorder %s126, %s127
    %p141 = scmp.eq.s32.totalorder %s16, 3
    %p142 = por %p140, %p141
    %p144 = scmp.ne.s32.totalorder %s127, %s143
    %p145 = scmp.eq.s32.totalorder %s16, 0
    %p146 = por %p144, %p145
    %p147 = scmp.le.s32.totalorder 1, %s10
    %p148 = scmp.lt.s32.totalorder %s10, 5
    %p149 = pnand %p147, %p148
    %p150 = pneg %p149
    // Predicated region
    $region9: #{depthwise_separable_conv1d.4} parent=5 // pred_check
      _
    $region10: #{depthwise_separable_conv1d.4} parent=5 // pred_check_branch
      %152 = sbr.rel (%p149) target = $region12
    $region11: #{depthwise_separable_conv1d.4} parent=5 // pred_region
      %s153 = ssub.s32 %s10, 1
      // Predicated region
      $region13: #{depthwise_separable_conv1d.4} parent=11 // pred_check
        %p154 = pneg %p71
      $region14: #{depthwise_separable_conv1d.4} parent=11 // pred_check_branch
        %156 = sbr.rel (%p154) target = $region16
      $region15: #{depthwise_separable_conv1d.4} parent=11 // pred_region
        _
      $region16: #{depthwise_separable_conv1d.4} parent=11 // pred_fallthru
        _
      // Predicated region
      $region17: #{depthwise_separable_conv1d.4} parent=11 // pred_check
        %p157 = pneg %p92
      $region18: #{depthwise_separable_conv1d.4} parent=11 // pred_check_branch
        %159 = sbr.rel (%p157) target = $region20
      $region19: #{depthwise_separable_conv1d.4} parent=11 // pred_region
        _
      $region20: #{depthwise_separable_conv1d.4} parent=11 // pred_fallthru
        _
      // Predicated region
      $region21: #{depthwise_separable_conv1d.4} parent=11 // pred_check
        %p160 = pneg %p113
      $region22: #{depthwise_separable_conv1d.4} parent=11 // pred_check_branch
        %162 = sbr.rel (%p160) target = $region24
      $region23: #{depthwise_separable_conv1d.4} parent=11 // pred_region
        _
      $region24: #{depthwise_separable_conv1d.4} parent=11 // pred_fallthru
        _
    $region12: #{depthwise_separable_conv1d.4} parent=5 // pred_fallthru
      _
    %p163 = scmp.lt.s32.totalorder %s10, 4
    // Predicated region
    $region25: #{depthwise_separable_conv1d.4} parent=5 // pred_check
      %p164 = pneg %p163
    $region26: #{depthwise_separable_conv1d.4} parent=5 // pred_check_branch
      %166 = sbr.rel (%p164) target = $region28
    $region27: #{depthwise_separable_conv1d.4} parent=5 // pred_region
      // Predicated region
      $region29: #{depthwise_separable_conv1d.4} parent=27 // pred_check
        %p167 = pneg %p44
      $region30: #{depthwise_separable_conv1d.4} parent=27 // pred_check_branch
        %169 = sbr.rel (%p167) target = $region32
      $region31: #{depthwise_separable_conv1d.4} parent=27 // pred_region
        %p170 = scmp.lt.s32.totalorder %s17, 3
        %s171 = scalar_select %p170, %s17, 3
        %p172 = scmp.lt.s32.totalorder %s18, 0
        %s173 = scalar_select %p172, %s18, 0
        %s174 = sadd.s32 %s173, %s171
        %s175 = smul.addr %s174, 4
        %s176 = scalar_lea.vmem %s0, %s175
      $region32: #{depthwise_separable_conv1d.4} parent=27 // pred_fallthru
        _
    $region28: #{depthwise_separable_conv1d.4} parent=5 // pred_fallthru
      _
    %p177 = scmp.le.s32.totalorder 1, %s10
    %p178 = scmp.lt.s32.totalorder %s10, 5
    %p179 = pnand %p177, %p178
    %p180 = pneg %p179
    // Predicated region
    $region33: #{depthwise_separable_conv1d.4} parent=5 // pred_check
      _
    $region34: #{depthwise_separable_conv1d.4} parent=5 // pred_check_branch
      %182 = sbr.rel (%p179) target = $region36
    $region35: #{depthwise_separable_conv1d.4} parent=5 // pred_region
      %s183 = ssub.s32 %s10, 1
      %p184 = scmp.lt.s32.totalorder %s19, 3
      %s185 = scalar_select %p184, %s19, 3
      %p186 = scmp.lt.s32.totalorder %s20, 0
      %s187 = scalar_select %p186, %s20, 0
      %s188 = sadd.s32 %s187, %s185
      %s189 = smul.addr %s188, 4
      %s190 = scalar_lea.vmem %s0, %s189
      %p191 = pneg %p50
      %p192 = pneg %p47
      %p193 = pneg %p71
      %p194 = pneg %p68
      %p195 = pneg %p92
      %p196 = pneg %p89
      %p197 = pneg %p113
      %p198 = pneg %p110
      %p199 = pneg %p139
      %p200 = pneg %p136
      %p201 = scmp.lt.s32.totalorder %s19, 3
      %s202 = scalar_select %p201, %s19, 3
      %s203 = smul.addr %s202, 8
      %s204 = scalar_lea.vmem %s4, %s203
      %p205 = scmp.lt.s32.totalorder %s19, 3
      %s206 = scalar_select %p205, %s19, 3
      %p207 = scmp.lt.s32.totalorder %s20, 0
      %s208 = scalar_select %p207, %s20, 0
      %s209 = sadd.s32 %s208, %s206
      %s210 = smul.addr %s209, 4
      %s211 = scalar_lea.vmem %s0, %s210
      %p212 = scmp.lt.s32.totalorder %s19, 3
      %s213 = scalar_select %p212, %s19, 3
      %s214 = smul.addr %s213, 8
      %s215 = scalar_lea.vmem %s4, %s214
      %p217 = scmp.eq.s32.totalorder %s20, 0
      // Predicated region
      $region37: #{depthwise_separable_conv1d.4} parent=35 // pred_check
        %p218 = pneg %p217
      $region38: #{depthwise_separable_conv1d.4} parent=35 // pred_check_branch
        %220 = sbr.rel (%p218) target = $region40
      $region39: #{depthwise_separable_conv1d.4} parent=35 // pred_region
        %vm221 = vcmask 15360
        %222 = vst.msk [vmem:[%s215] sm:$0xff] %vm221, 0.0
      $region40: #{depthwise_separable_conv1d.4} parent=35 // pred_fallthru
        _
      %v223 = vld [vmem:[%s211] sm:$0xf]
      %v224 = vld [vmem:[%s2] sm:$0xff]
      %v225 = vld [vmem:[%s1] sm:$0xff]
      %v226 = vmul.f32 %v225, 0.001953125
      %v227 = vmul.f32 %v226, %v226
      %229 = vrot.lane.b32.xlu0 %v227, 1
      %v230 = vpop.permute.xlu0 %229
      %v232 = vsub.f32 %v226, %v230
      %v233 = vmax.f32 %v232, 0.0
      %v234 = vadd.f32 %v233, 1e-05
      %v235 = vrsqrt.pop %v234
      %237 = vrot.lane.b32.xlu0 %v235, 127
      %v238 = vpop.permute.xlu0 %237
      %v240 = vmul.f32 %v224, %v238
      %v241 = vmul.f32 %v226, %v240
      %243 = vrot.lane.b32.xlu0 %v241, 1
      %v244 = vpop.permute.xlu0 %243
      %v246 = vsub.f32 %v224, %v244
      %v247 = vunpack.c.l.bf16 %v223
      %249 = vset.pattern.permute.xlu0 0
      %250 = vperm.xlu0 %249, %v240
      %v251 = vpop.permute.xlu0 %250
      %v253 = vmul.f32 %v247, %v251
      %255 = vset.pattern.permute.xlu0 1
      %256 = vperm.xlu0 %255, %v246
      %v257 = vpop.permute.xlu0 %256
      %v259 = vadd.f32 %v253, %v257
      %v260 = vxor.u32 %v259, 2147483648
      %v261 = vmul.f32 %v260, 1.442695
      %v262 = vpow.pop %v261
      %v263 = vadd.f32 %v262, 1.0
      %v264 = vrcp.pop %v263
      %v265 = vmul.f32 1.0, %v264
      %v266 = vmul.f32 %v259, %v265
      %v267 = vld [vmem:[%s3] sm:$0xf]
      %v268 = vpack.c.bf16 %v266, %v266
      %vm269 = vcmask 64512
      %v271 = vsel %vm269, %v267, 0
      %vm273 = vcmask 1043456
      %v275 = vsel %vm273, %v268, 0
      %277 = vmatprep.subr.bf16.mxu0 0
      %278 = vmatpush1.bf16.msra.mxu0 0
      %279 = vmatprep.subr.bf16.mxu0 0
      %280 = vmatpush1.bf16.msra.mxu0 0
      %281 = vmatprep.subr.bf16.mxu0 0
      %282 = vmatpush1.bf16.msra.mxu0 0
      %283 = vmatprep.subr.bf16.mxu0 0
      %284 = vmatpush1.bf16.msra.mxu0 0
      %285 = vmatprep.subr.bf16.mxu0 0
      %286 = vmatpush1.bf16.msra.mxu0 0
      %287 = vmatprep.subr.bf16.mxu0 0
      %288 = vmatpush1.bf16.msra.mxu0 0
      %289 = vmatprep.subr.bf16.mxu0 0
      %290 = vmatpush1.bf16.msra.mxu0 0
      %291 = vmatprep.subr.bf16.mxu0 0
      %292 = vmatpush1.bf16.msra.mxu0 %v275
      %293 = vmatprep.subr.bf16.mxu0 0
      %294 = vmatpush2.bf16.msra.mxu0 0
      %295 = vmatprep.subr.bf16.mxu0 0
      %296 = vmatpush2.bf16.msra.mxu0 0
      %297 = vmatprep.subr.bf16.mxu0 0
      %298 = vmatpush2.bf16.msra.mxu0 0
      %299 = vmatprep.subr.bf16.mxu0 0
      %300 = vmatpush2.bf16.msra.mxu0 0
      %301 = vmatprep.subr.bf16.mxu0 0
      %302 = vmatpush2.bf16.msra.mxu0 0
      %303 = vmatprep.subr.bf16.mxu0 0
      %304 = vmatpush2.bf16.msra.mxu0 0
      %305 = vmatprep.subr.bf16.mxu0 0
      %306 = vmatpush2.bf16.msra.mxu0 0
      %307 = vmatprep.subr.bf16.mxu0 0
      %308 = vmatpush2.bf16.msra.mxu0 0
      %309 = vmatprep.mubr.bf16.mxu0 0
      %310 = vmatmul.mubr.bf16.gmra.mxu0 %v271
      %v311 = vpop.f32.mrf.mxu0
      %v312 = vadd.f32 0.0, %v311
      %v313 = vpop.f32.mrf.mxu0
      %v314 = vpop.f32.mrf.mxu0
      %v315 = vpop.f32.mrf.mxu0
      %316 = vdwg.mxu0
      %v317 = vld [vmem:[%s215] sm:$0xff]
      %318 = vadd.xlane.f32.xlu0 %v312
      %v319 = vpop.xlane.xlu0 %318
      %v320 = vmul.f32 %v312, %v312
      %321 = vadd.xlane.f32.xlu0 %v320
      %v322 = vpop.xlane.xlu0 %321
      %vm323 = vcmask 7168
      %v324 = vsel %vm323, %v319, %v322
      %v325 = vadd.f32 %v317, %v324
      %vm326 = vcmask 15360
      %327 = vst.msk [vmem:[%s215] sm:$0xff] %vm326, %v325
      %p328 = scmp.lt.s32.totalorder %s19, 3
      %s329 = scalar_select %p328, %s19, 3
      %s330 = smul.addr %s329, 8
      %s331 = scalar_lea.vmem %s4, %s330
      // Predicated region
      $region41: #{depthwise_separable_conv1d.4} parent=35 // pred_check
        %p332 = pneg %p136
      $region42: #{depthwise_separable_conv1d.4} parent=35 // pred_check_branch
        %334 = sbr.rel (%p332) target = $region44
      $region43: #{depthwise_separable_conv1d.4} parent=35 // pred_region
        _
      $region44: #{depthwise_separable_conv1d.4} parent=35 // pred_fallthru
        _
    $region36: #{depthwise_separable_conv1d.4} parent=5 // pred_fallthru
      _
    %p335 = scmp.le.s32.totalorder 2, %s10
    // Predicated region
    $region45: #{depthwise_separable_conv1d.4} parent=5 // pred_check
      %p336 = pneg %p335
    $region46: #{depthwise_separable_conv1d.4} parent=5 // pred_check_branch
      %338 = sbr.rel (%p336) target = $region48
    $region47: #{depthwise_separable_conv1d.4} parent=5 // pred_region
      %s339 = ssub.s32 %s10, 2
      // Predicated region
      $region49: #{depthwise_separable_conv1d.4} parent=47 // pred_check
        %p340 = pneg %p142
      $region50: #{depthwise_separable_conv1d.4} parent=47 // pred_check_branch
        %342 = sbr.rel (%p340) target = $region52
      $region51: #{depthwise_separable_conv1d.4} parent=47 // pred_region
        %p343 = scmp.lt.s32.totalorder %s21, 3
        %s344 = scalar_select %p343, %s21, 3
        %s345 = smul.addr %s344, 8
        %s346 = scalar_lea.vmem %s4, %s345
      $region52: #{depthwise_separable_conv1d.4} parent=47 // pred_fallthru
        _
    $region48: #{depthwise_separable_conv1d.4} parent=5 // pred_fallthru
      _
  $region6: #{depthwise_separable_conv1d.4} parent=0 // loop_footer
    %s14 = sadd.s32 1, %s10
  $region7: #{depthwise_separable_conv1d.4} parent=0 // loop_footer_branch
    %9 = sbr.rel target = $region3
  $region8: #{depthwise_separable_conv1d.4} parent=0 // loop_exit
    _

// kernel: depthwise_separable_conv1d.5
$region0: #{depthwise_separable_conv1d.5}
  #allocation0 [shape = 'u32[]', space=smem, size = 0x4, offset = 0x4, fixed_abs, tag = 'smem constant byte address 0x4 - core index']
  #allocation1 [shape = 'u32[144,128]{1,0:T(1,128)}', space=vmem, size = 0x12000, scoped, tag = 'internal scratch']
  %s0 = inlined_call_operand.vmem [shape: bf16[4,8,128], index: 0, kind: input, shape index: {}]
  %s1 = inlined_call_operand.vmem [shape: f32[8,2], index: 1, kind: input, shape index: {}]
  %s2 = inlined_call_operand.vmem [shape: f32[8,2], index: 2, kind: input, shape index: {}]
  %s3 = inlined_call_operand.vmem [shape: bf16[8,8], index: 3, kind: input, shape index: {}]
  %s4 = inlined_call_operand.vmem [shape: f32[8,2], index: 4, kind: input, shape index: {}]
  %s5 = inlined_call_operand.vmem [shape: f32[8,2], index: 5, kind: input, shape index: {}]
  %s6 = inlined_call_operand.hbm [shape: f32[4,8,128], index: 6, kind: output, shape index: {}]
  %s7 = sld [smem:[#allocation0]]
  $region57: #{depthwise_separable_conv1d.5} parent=0
    _
  %s9 = ssub.s32 1, %s7
  %s10 = scalar_select 0, %s9, %s7
  $region1: #{depthwise_separable_conv1d.5} parent=0
    #allocation2 [shape = 'u8[8192]{0}', space=vmem, size = 0x2000, scoped, tag = 'output window, operand 0']
    #allocation3 [shape = 's32[2]{0}', space=sflag, size = 0x8, scoped, tag = 'scoped memory for depthwise_separable_conv1d.5']
    %11 = vsyncpa [#allocation3], 0
    %s12 = scalar_lea.sflag [#allocation3], 1
    %13 = vsyncpa %s12, 0
    loop: start=0, step=1, limit=6
    $region2: #{depthwise_separable_conv1d.5} parent=1 // loop_pre_header
      _
    $region3: #{depthwise_separable_conv1d.5} parent=1 // loop_header
      %s15 = sphi 0, %s19
      %p16 = scmp.ge.s32.totalorder %s15, 6
      %s22 = sphi 0, %s34
      %s23 = sphi 0, %s30
      %s24 = sphi 0, %s22
      %s25 = sphi 0, %s23
      %s26 = sphi 0, %s24
      %s27 = sphi 0, %s25
      %s39 = sphi 0, %s41
      %s42 = sphi 0, %s39
      %s43 = sphi 0, %s42
      %s59 = sphi 0, %s43
      %s63 = sphi 0, %s63
      %s65 = sphi 0, %s63
      %s66 = sphi 0, %s65
      %s80 = sphi 0, %s66
      %s84 = sphi 0, %s84
      %s86 = sphi 0, %s84
      %s87 = sphi 0, %s86
      %s101 = sphi 0, %s87
      %s105 = sphi 0, %s105
      %s107 = sphi 0, %s105
      %s108 = sphi 0, %s107
      %s122 = sphi 0, %s108
      %s126 = sphi 0, %s126
      %s128 = sphi 0, %s126
      %s129 = sphi 0, %s128
      %s143 = sphi 0, %s129
      %s147 = sphi 0, %s147
      %s149 = sphi 0, %s147
      %s150 = sphi 0, %s149
      %s164 = sphi 0, %s150
      %s172 = sphi 0, %s174
      %s175 = sphi 0, %s172
      %s176 = sphi 0, %s175
      %s192 = sphi 0, %s176
    $region4: #{depthwise_separable_conv1d.5} parent=1 // loop_header_branch
      %18 = sbr.rel (%p16) target = $region8
    $region5: #{depthwise_separable_conv1d.5} parent=1 // loop_body
      %s20 = ssub.s32 %s15, 1
      %s21 = ssub.s32 %s15, 2
      %s28 = sadd.s32 1, %s23
      %p29 = scmp.ge.s32.totalorder %s28, 1
      %s30 = scalar_select %p29, 0, %s28
      %s31 = sadd.s32 1, %s22
      %s32 = scalar_select %p29, %s31, %s22
      %p33 = scmp.ge.s32.totalorder %s32, 4
      %s34 = scalar_select %p33, 0, %s32
      %s35 = ssub.s32 %s22, %s34
      %s36 = ssub.s32 %s23, %s30
      %s37 = sor.u32 %s35, %s36
      %p38 = scmp.eq.s32.totalorder %s37, 0
      %s40 = sadd.s32 %s39, 1
      %s41 = scalar_select %p38, %s39, %s40
      %p44 = pneg %p38
      %p45 = scmp.eq.s32.totalorder %s15, 3
      %p46 = por %p44, %p45
      %p47 = scmp.ne.s32.totalorder %s39, %s42
      %p48 = scmp.eq.s32.totalorder %s15, 0
      %p49 = por %p47, %p48
      %p50 = scmp.ne.s32.totalorder %s39, %s42
      %p51 = scmp.eq.s32.totalorder %s20, 3
      %p52 = por %p50, %p51
      %p53 = scmp.ne.s32.totalorder %s42, %s43
      %p54 = scmp.eq.s32.totalorder %s20, 0
      %p55 = por %p53, %p54
      %p56 = scmp.ne.s32.totalorder %s42, %s43
      %p57 = scmp.eq.s32.totalorder %s21, 3
      %p58 = por %p56, %p57
      %p60 = scmp.ne.s32.totalorder %s43, %s59
      %p61 = scmp.eq.s32.totalorder %s21, 0
      %p62 = por %p60, %p61
      %s64 = sadd.s32 %s63, 1
      %p67 = scmp.eq.s32.totalorder %s15, 3
      %p68 = scmp.ne.s32.totalorder %s63, %s65
      %p69 = scmp.eq.s32.totalorder %s15, 0
      %p70 = por %p68, %p69
      %p71 = scmp.ne.s32.totalorder %s63, %s65
      %p72 = scmp.eq.s32.totalorder %s20, 3
      %p73 = por %p71, %p72
      %p74 = scmp.ne.s32.totalorder %s65, %s66
      %p75 = scmp.eq.s32.totalorder %s20, 0
      %p76 = por %p74, %p75
      %p77 = scmp.ne.s32.totalorder %s65, %s66
      %p78 = scmp.eq.s32.totalorder %s21, 3
      %p79 = por %p77, %p78
      %p81 = scmp.ne.s32.totalorder %s66, %s80
      %p82 = scmp.eq.s32.totalorder %s21, 0
      %p83 = por %p81, %p82
      %s85 = sadd.s32 %s84, 1
      %p88 = scmp.eq.s32.totalorder %s15, 3
      %p89 = scmp.ne.s32.totalorder %s84, %s86
      %p90 = scmp.eq.s32.totalorder %s15, 0
      %p91 = por %p89, %p90
      %p92 = scmp.ne.s32.totalorder %s84, %s86
      %p93 = scmp.eq.s32.totalorder %s20, 3
      %p94 = por %p92, %p93
      %p95 = scmp.ne.s32.totalorder %s86, %s87
      %p96 = scmp.eq.s32.totalorder %s20, 0
      %p97 = por %p95, %p96
      %p98 = scmp.ne.s32.totalorder %s86, %s87
      %p99 = scmp.eq.s32.totalorder %s21, 3
      %p100 = por %p98, %p99
      %p102 = scmp.ne.s32.totalorder %s87, %s101
      %p103 = scmp.eq.s32.totalorder %s21, 0
      %p104 = por %p102, %p103
      %s106 = sadd.s32 %s105, 1
      %p109 = scmp.eq.s32.totalorder %s15, 3
      %p110 = scmp.ne.s32.totalorder %s105, %s107
      %p111 = scmp.eq.s32.totalorder %s15, 0
      %p112 = por %p110, %p111
      %p113 = scmp.ne.s32.totalorder %s105, %s107
      %p114 = scmp.eq.s32.totalorder %s20, 3
      %p115 = por %p113, %p114
      %p116 = scmp.ne.s32.totalorder %s107, %s108
      %p117 = scmp.eq.s32.totalorder %s20, 0
      %p118 = por %p116, %p117
      %p119 = scmp.ne.s32.totalorder %s107, %s108
      %p120 = scmp.eq.s32.totalorder %s21, 3
      %p121 = por %p119, %p120
      %p123 = scmp.ne.s32.totalorder %s108, %s122
      %p124 = scmp.eq.s32.totalorder %s21, 0
      %p125 = por %p123, %p124
      %s127 = sadd.s32 %s126, 1
      %p130 = scmp.eq.s32.totalorder %s15, 3
      %p131 = scmp.ne.s32.totalorder %s126, %s128
      %p132 = scmp.eq.s32.totalorder %s15, 0
      %p133 = por %p131, %p132
      %p134 = scmp.ne.s32.totalorder %s126, %s128
      %p135 = scmp.eq.s32.totalorder %s20, 3
      %p136 = por %p134, %p135
      %p137 = scmp.ne.s32.totalorder %s128, %s129
      %p138 = scmp.eq.s32.totalorder %s20, 0
      %p139 = por %p137, %p138
      %p140 = scmp.ne.s32.totalorder %s128, %s129
      %p141 = scmp.eq.s32.totalorder %s21, 3
      %p142 = por %p140, %p141
      %p144 = scmp.ne.s32.totalorder %s129, %s143
      %p145 = scmp.eq.s32.totalorder %s21, 0
      %p146 = por %p144, %p145
      %s148 = sadd.s32 %s147, 1
      %p151 = scmp.eq.s32.totalorder %s15, 3
      %p152 = scmp.ne.s32.totalorder %s147, %s149
      %p153 = scmp.eq.s32.totalorder %s15, 0
      %p154 = por %p152, %p153
      %p155 = scmp.ne.s32.totalorder %s147, %s149
      %p156 = scmp.eq.s32.totalorder %s20, 3
      %p157 = por %p155, %p156
      %p158 = scmp.ne.s32.totalorder %s149, %s150
      %p159 = scmp.eq.s32.totalorder %s20, 0
      %p160 = por %p158, %p159
      %p161 = scmp.ne.s32.totalorder %s149, %s150
      %p162 = scmp.eq.s32.totalorder %s21, 3
      %p163 = por %p161, %p162
      %p165 = scmp.ne.s32.totalorder %s150, %s164
      %p166 = scmp.eq.s32.totalorder %s21, 0
      %p167 = por %p165, %p166
      %s168 = ssub.s32 %s22, %s34
      %s169 = ssub.s32 %s23, %s30
      %s170 = sor.u32 %s168, %s169
      %p171 = scmp.eq.s32.totalorder %s170, 0
      %s173 = sadd.s32 %s172, 1
      %s174 = scalar_select %p171, %s172, %s173
      %p177 = pneg %p171
      %p178 = scmp.eq.s32.totalorder %s15, 3
      %p179 = por %p177, %p178
      %p180 = scmp.ne.s32.totalorder %s172, %s175
      %p181 = scmp.eq.s32.totalorder %s15, 0
      %p182 = por %p180, %p181
      %p183 = scmp.ne.s32.totalorder %s172, %s175
      %p184 = scmp.eq.s32.totalorder %s20, 3
      %p185 = por %p183, %p184
      %p186 = scmp.ne.s32.totalorder %s175, %s176
      %p187 = scmp.eq.s32.totalorder %s20, 0
      %p188 = por %p186, %p187
      %p189 = scmp.ne.s32.totalorder %s175, %s176
      %p190 = scmp.eq.s32.totalorder %s21, 3
      %p191 = por %p189, %p190
      %p193 = scmp.ne.s32.totalorder %s176, %s192
      %p194 = scmp.eq.s32.totalorder %s21, 0
      %p195 = por %p193, %p194
      %p196 = scmp.le.s32.totalorder 1, %s15
      %p197 = scmp.lt.s32.totalorder %s15, 5
      %p198 = pnand %p196, %p197
      %p199 = pneg %p198
      // Predicated region
      $region9: #{depthwise_separable_conv1d.5} parent=5 // pred_check
        _
      $region10: #{depthwise_separable_conv1d.5} parent=5 // pred_check_branch
        %201 = sbr.rel (%p198) target = $region12
      $region11: #{depthwise_separable_conv1d.5} parent=5 // pred_region
        %s202 = ssub.s32 %s15, 1
        // Predicated region
        $region13: #{depthwise_separable_conv1d.5} parent=11 // pred_check
          %p203 = pneg %p76
        $region14: #{depthwise_separable_conv1d.5} parent=11 // pred_check_branch
          %205 = sbr.rel (%p203) target = $region16
        $region15: #{depthwise_separable_conv1d.5} parent=11 // pred_region
          _
        $region16: #{depthwise_separable_conv1d.5} parent=11 // pred_fallthru
          _
        // Predicated region
        $region17: #{depthwise_separable_conv1d.5} parent=11 // pred_check
          %p206 = pneg %p97
        $region18: #{depthwise_separable_conv1d.5} parent=11 // pred_check_branch
          %208 = sbr.rel (%p206) target = $region20
        $region19: #{depthwise_separable_conv1d.5} parent=11 // pred_region
          _
        $region20: #{depthwise_separable_conv1d.5} parent=11 // pred_fallthru
          _
        // Predicated region
        $region21: #{depthwise_separable_conv1d.5} parent=11 // pred_check
          %p209 = pneg %p118
        $region22: #{depthwise_separable_conv1d.5} parent=11 // pred_check_branch
          %211 = sbr.rel (%p209) target = $region24
        $region23: #{depthwise_separable_conv1d.5} parent=11 // pred_region
          _
        $region24: #{depthwise_separable_conv1d.5} parent=11 // pred_fallthru
          _
        // Predicated region
        $region25: #{depthwise_separable_conv1d.5} parent=11 // pred_check
          %p212 = pneg %p139
        $region26: #{depthwise_separable_conv1d.5} parent=11 // pred_check_branch
          %214 = sbr.rel (%p212) target = $region28
        $region27: #{depthwise_separable_conv1d.5} parent=11 // pred_region
          _
        $region28: #{depthwise_separable_conv1d.5} parent=11 // pred_fallthru
          _
        // Predicated region
        $region29: #{depthwise_separable_conv1d.5} parent=11 // pred_check
          %p215 = pneg %p160
        $region30: #{depthwise_separable_conv1d.5} parent=11 // pred_check_branch
          %217 = sbr.rel (%p215) target = $region32
        $region31: #{depthwise_separable_conv1d.5} parent=11 // pred_region
          _
        $region32: #{depthwise_separable_conv1d.5} parent=11 // pred_fallthru
          _
      $region12: #{depthwise_separable_conv1d.5} parent=5 // pred_fallthru
        _
      %p218 = scmp.lt.s32.totalorder %s15, 4
      // Predicated region
      $region33: #{depthwise_separable_conv1d.5} parent=5 // pred_check
        %p219 = pneg %p218
      $region34: #{depthwise_separable_conv1d.5} parent=5 // pred_check_branch
        %221 = sbr.rel (%p219) target = $region36
      $region35: #{depthwise_separable_conv1d.5} parent=5 // pred_region
        // Predicated region
        $region37: #{depthwise_separable_conv1d.5} parent=35 // pred_check
          %p222 = pneg %p49
        $region38: #{depthwise_separable_conv1d.5} parent=35 // pred_check_branch
          %224 = sbr.rel (%p222) target = $region40
        $region39: #{depthwise_separable_conv1d.5} parent=35 // pred_region
          %p225 = scmp.lt.s32.totalorder %s22, 3
          %s226 = scalar_select %p225, %s22, 3
          %p227 = scmp.lt.s32.totalorder %s23, 0
          %s228 = scalar_select %p227, %s23, 0
          %s229 = sadd.s32 %s228, %s226
          %s230 = smul.addr %s229, 4
          %s231 = scalar_lea.vmem %s0, %s230
        $region40: #{depthwise_separable_conv1d.5} parent=35 // pred_fallthru
          _
      $region36: #{depthwise_separable_conv1d.5} parent=5 // pred_fallthru
        _
      %p232 = scmp.le.s32.totalorder 1, %s15
      %p233 = scmp.lt.s32.totalorder %s15, 5
      %p234 = pnand %p232, %p233
      %p235 = pneg %p234
      // Predicated region
      $region41: #{depthwise_separable_conv1d.5} parent=5 // pred_check
        _
      $region42: #{depthwise_separable_conv1d.5} parent=5 // pred_check_branch
        %237 = sbr.rel (%p234) target = $region44
      $region43: #{depthwise_separable_conv1d.5} parent=5 // pred_region
        %s238 = ssub.s32 %s15, 1
        %p239 = scmp.lt.s32.totalorder %s24, 3
        %s240 = scalar_select %p239, %s24, 3
        %p241 = scmp.lt.s32.totalorder %s25, 0
        %s242 = scalar_select %p241, %s25, 0
        %s243 = sadd.s32 %s242, %s240
        %s244 = smul.addr %s243, 4
        %s245 = scalar_lea.vmem %s0, %s244
        %p246 = pneg %p55
        %p247 = pneg %p52
        %p248 = pneg %p76
        %p249 = pneg %p73
        %p250 = pneg %p97
        %p251 = pneg %p94
        %p252 = pneg %p118
        %p253 = pneg %p115
        %p254 = pneg %p139
        %p255 = pneg %p136
        %p256 = pneg %p160
        %p257 = pneg %p157
        %p258 = pneg %p188
        %p259 = pneg %p185
        %s260 = sand.u32 %s175, 1
        %s261 = scalar_lea.sflag [#allocation3], %s260
        %s262 = sand.u32 %s175, 1
        %s263 = smul.addr %s262, 8
        %s264 = scalar_lea.vmem [#allocation2], %s263
        %p265 = scmp.lt.s32.totalorder %s24, 3
        %s266 = scalar_select %p265, %s24, 3
        %p267 = scmp.lt.s32.totalorder %s25, 0
        %s268 = scalar_select %p267, %s25, 0
        %s269 = sadd.s32 %s268, %s266
        %s270 = smul.addr %s269, 4
        %s271 = scalar_lea.vmem %s0, %s270
        %v273 = vld [vmem:[%s271] sm:$0xf]
        %v274 = vld [vmem:[%s2] sm:$0xff]
        %v275 = vld [vmem:[%s1] sm:$0xff]
        %v276 = vmul.f32 %v275, 0.001953125
        %v277 = vmul.f32 %v276, %v276
        %279 = vrot.lane.b32.xlu0 %v277, 1
        %v280 = vpop.permute.xlu0 %279
        %v282 = vsub.f32 %v276, %v280
        %v283 = vmax.f32 %v282, 0.0
        %v284 = vadd.f32 %v283, 1e-05
        %v285 = vrsqrt.pop %v284
        %287 = vrot.lane.b32.xlu0 %v285, 127
        %v288 = vpop.permute.xlu0 %287
        %v290 = vmul.f32 %v274, %v288
        %v291 = vmul.f32 %v276, %v290
        %293 = vrot.lane.b32.xlu0 %v291, 1
        %v294 = vpop.permute.xlu0 %293
        %v296 = vsub.f32 %v274, %v294
        %v297 = vunpack.c.l.bf16 %v273
        %299 = vset.pattern.permute.xlu0 0
        %300 = vperm.xlu0 %299, %v290
        %v301 = vpop.permute.xlu0 %300
        %v303 = vmul.f32 %v297, %v301
        %305 = vset.pattern.permute.xlu0 1
        %306 = vperm.xlu0 %305, %v296
        %v307 = vpop.permute.xlu0 %306
        %v309 = vadd.f32 %v303, %v307
        %v310 = vxor.u32 %v309, 2147483648
        %v311 = vmul.f32 %v310, 1.442695
        %v312 = vpow.pop %v311
        %v313 = vadd.f32 %v312, 1.0
        %v314 = vrcp.pop %v313
        %v315 = vmul.f32 1.0, %v314
        %v316 = vmul.f32 %v309, %v315
        %v317 = vld [vmem:[%s3] sm:$0xf]
        %v318 = vpack.c.bf16 %v316, %v316
        %vm319 = vcmask 64512
        %v321 = vsel %vm319, %v317, 0
        %vm323 = vcmask 1043456
        %v325 = vsel %vm323, %v318, 0
        %327 = vmatprep.subr.bf16.mxu0 0
        %328 = vmatpush1.bf16.msra.mxu0 0
        %329 = vmatprep.subr.bf16.mxu0 0
        %330 = vmatpush1.bf16.msra.mxu0 0
        %331 = vmatprep.subr.bf16.mxu0 0
        %332 = vmatpush1.bf16.msra.mxu0 0
        %333 = vmatprep.subr.bf16.mxu0 0
        %334 = vmatpush1.bf16.msra.mxu0 0
        %335 = vmatprep.subr.bf16.mxu0 0
        %336 = vmatpush1.bf16.msra.mxu0 0
        %337 = vmatprep.subr.bf16.mxu0 0
        %338 = vmatpush1.bf16.msra.mxu0 0
        %339 = vmatprep.subr.bf16.mxu0 0
        %340 = vmatpush1.bf16.msra.mxu0 0
        %341 = vmatprep.subr.bf16.mxu0 0
        %342 = vmatpush1.bf16.msra.mxu0 %v325
        %343 = vmatprep.subr.bf16.mxu0 0
        %344 = vmatpush2.bf16.msra.mxu0 0
        %345 = vmatprep.subr.bf16.mxu0 0
        %346 = vmatpush2.bf16.msra.mxu0 0
        %347 = vmatprep.subr.bf16.mxu0 0
        %348 = vmatpush2.bf16.msra.mxu0 0
        %349 = vmatprep.subr.bf16.mxu0 0
        %350 = vmatpush2.bf16.msra.mxu0 0
        %351 = vmatprep.subr.bf16.mxu0 0
        %352 = vmatpush2.bf16.msra.mxu0 0
        %353 = vmatprep.subr.bf16.mxu0 0
        %354 = vmatpush2.bf16.msra.mxu0 0
        %355 = vmatprep.subr.bf16.mxu0 0
        %356 = vmatpush2.bf16.msra.mxu0 0
        %357 = vmatprep.subr.bf16.mxu0 0
        %358 = vmatpush2.bf16.msra.mxu0 0
        %359 = vmatprep.mubr.bf16.mxu0 0
        %360 = vmatmul.mubr.bf16.gmra.mxu0 %v321
        %v361 = vpop.f32.mrf.mxu0
        %v362 = vadd.f32 0.0, %v361
        %v363 = vpop.f32.mrf.mxu0
        %v364 = vpop.f32.mrf.mxu0
        %v365 = vpop.f32.mrf.mxu0
        %366 = vdwg.mxu0
        %v367 = vld [vmem:[%s5] sm:$0xff]
        %v368 = vld [vmem:[%s4] sm:$0xff]
        %v369 = vmul.f32 %v368, 0.001953125
        %v370 = vmul.f32 %v369, %v369
        %372 = vrot.lane.b32.xlu0 %v370, 1
        %v373 = vpop.permute.xlu0 %372
        %v375 = vsub.f32 %v369, %v373
        %v376 = vmax.f32 %v375, 0.0
        %v377 = vadd.f32 %v376, 1e-05
        %v378 = vrsqrt.pop %v377
        %380 = vrot.lane.b32.xlu0 %v378, 127
        %v381 = vpop.permute.xlu0 %380
        %v383 = vmul.f32 %v367, %v381
        %v384 = vmul.f32 %v369, %v383
        %386 = vrot.lane.b32.xlu0 %v384, 1
        %v387 = vpop.permute.xlu0 %386
        %v389 = vsub.f32 %v367, %v387
        %391 = vset.pattern.permute.xlu0 0
        %392 = vperm.xlu0 %391, %v383
        %v393 = vpop.permute.xlu0 %392
        %v395 = vmul.f32 %v362, %v393
        %397 = vset.pattern.permute.xlu0 1
        %398 = vperm.xlu0 %397, %v389
        %v399 = vpop.permute.xlu0 %398
        %v401 = vadd.f32 %v395, %v399
        %v402 = vxor.u32 %v401, 2147483648
        %v403 = vmul.f32 %v402, 1.442695
        %v404 = vpow.pop %v403
        %v405 = vadd.f32 %v404, 1.0
        %v406 = vrcp.pop %v405
        %v407 = vmul.f32 1.0, %v406
        %v408 = vmul.f32 %v401, %v407
        %409 = vst [vmem:[%s264] sm:$0xff] %v408
        %s410 = sand.u32 %s175, 1
        %s411 = scalar_lea.sflag [#allocation3], %s410
        %s412 = sand.u32 %s175, 1
        %s413 = smul.addr %s412, 8
        %s414 = scalar_lea.vmem [#allocation2], %s413
        // Predicated region
        $region45: #{depthwise_separable_conv1d.5} parent=43 // pred_check
          %p415 = pneg %p185
        $region46: #{depthwise_separable_conv1d.5} parent=43 // pred_check_branch
          %417 = sbr.rel (%p415) target = $region48
        $region47: #{depthwise_separable_conv1d.5} parent=43 // pred_region
          %s419 = ssub.s32 128, 128
          %420 = vsyncadd %s411, %s419
          %s421 = sadd.s32 %s25, %s24
          %s422 = smul.addr %s421, 128
          %s423 = scalar_lea.hbm %s6, %s422
          %s425 = sshll.u32 %s414, 4
          %s426 = int_to_ptr.vmem [resolvable:$true] %s425
          %428 = dma.vmem_to_hbm [thread:$0]  %s426, 128, %s423, %s411
        $region48: #{depthwise_separable_conv1d.5} parent=43 // pred_fallthru
          _
      $region44: #{depthwise_separable_conv1d.5} parent=5 // pred_fallthru
        _
      %p429 = scmp.le.s32.totalorder 2, %s15
      // Predicated region
      $region49: #{depthwise_separable_conv1d.5} parent=5 // pred_check
        %p430 = pneg %p429
      $region50: #{depthwise_separable_conv1d.5} parent=5 // pred_check_branch
        %432 = sbr.rel (%p430) target = $region52
      $region51: #{depthwise_separable_conv1d.5} parent=5 // pred_region
        %s433 = ssub.s32 %s15, 2
        // Predicated region
        $region53: #{depthwise_separable_conv1d.5} parent=51 // pred_check
          %p434 = pneg %p191
        $region54: #{depthwise_separable_conv1d.5} parent=51 // pred_check_branch
          %436 = sbr.rel (%p434) target = $region56
        $region55: #{depthwise_separable_conv1d.5} parent=51 // pred_region
          %s437 = sand.u32 %s176, 1
          %s438 = scalar_lea.sflag [#allocation3], %s437
          %s439 = sand.u32 %s176, 1
          %s440 = smul.addr %s439, 8
          %s441 = scalar_lea.vmem [#allocation2], %s440
          %442 = dma.done %s438, 128
        $region56: #{depthwise_separable_conv1d.5} parent=51 // pred_fallthru
          _
      $region52: #{depthwise_separable_conv1d.5} parent=5 // pred_fallthru
        _
    $region6: #{depthwise_separable_conv1d.5} parent=1 // loop_footer
      %s19 = sadd.s32 1, %s15
    $region7: #{depthwise_separable_conv1d.5} parent=1 // loop_footer_branch
      %14 = sbr.rel target = $region3
    $region8: #{depthwise_separable_conv1d.5} parent=1 // loop_exit
      _
    %443 = vsyncpa [#allocation3], 1
    %s444 = scalar_lea.sflag [#allocation3], 1
    %445 = vsyncpa %s444, 1

</llo_original>
